<compile_context>
chip_gen: v7x
topology: tpu7x:2x2x1
jax: 0.10.0
libtpu: 0.0.40
codegen_flags: <defaults>
</compile_context>

<pallas_src>
import functools

import jax
import jax.numpy as jnp
import numpy as np
from jax.experimental import pallas as pl
from jax.experimental.pallas import tpu as pltpu


def _attention_layer_kernel(q_ref, k_ref, v_ref,
                            wq_ref, bq_ref, wk_ref, bk_ref,
                            wv_ref, bv_ref, wo_ref, bo_ref,
                            out_ref, attn_ref,
                            k_scr, v_scr, o_scr,
                            *, num_heads, scale):
    H = num_heads
    d_k = wq_ref.shape[1]
    d_v = wv_ref.shape[1]
    E = d_k // H
    Dv = d_v // H

    # ---- K / V projections: once per batch (first query tile), cached in VMEM ----
    @pl.when(pl.program_id(1) == 0)
    def _():
        k = k_ref[0].astype(jnp.bfloat16)                      # (S, d_model)
        v = v_ref[0].astype(jnp.bfloat16)                      # (S, d_model)
        K = jnp.dot(k, wk_ref[...], preferred_element_type=jnp.float32) + bk_ref[...]
        V = jnp.dot(v, wv_ref[...], preferred_element_type=jnp.float32) + bv_ref[...]
        k_scr[...] = K.astype(jnp.bfloat16)                    # (S, d_k)
        v_scr[...] = V.astype(jnp.bfloat16)                    # (S, d_v)

    # ---- Q projection for this query tile (softmax scale folded into Q) ----
    q = q_ref[0].astype(jnp.bfloat16)                          # (TQ, d_model)
    Qf = jnp.dot(q, wq_ref[...], preferred_element_type=jnp.float32) + bq_ref[...]
    Q = (Qf * scale).astype(jnp.bfloat16)                      # (TQ, d_k)

    Kb = k_scr[...]                                            # (S, d_k)  bf16
    Vb = v_scr[...]                                            # (S, d_v)  bf16

    for h in range(H):                                         # static loop over heads
        Qh = Q[:, h * E:(h + 1) * E]                           # (TQ, E)
        Kh = Kb[:, h * E:(h + 1) * E]                          # (S, E)
        Vh = Vb[:, h * Dv:(h + 1) * Dv]                        # (S, Dv)

        # scores = (scale*Qh) @ Kh^T, contracted on the feature dim (no transpose).
        scores = jax.lax.dot_general(
            Qh, Kh, (((1,), (1,)), ((), ())),
            preferred_element_type=jnp.float32)                # (TQ, S) f32

        # Numerically stable softmax along S; reciprocal on the EUP.
        m = jnp.max(scores, axis=-1, keepdims=True)
        e = jnp.exp(scores - m)
        inv = pl.reciprocal(jnp.sum(e, axis=-1, keepdims=True), approx=True)
        A = e * inv                                            # (TQ, S) f32

        attn_ref[0, h] = A

        # Head output written directly into its slice of the O slab (no concat).
        o_scr[:, h * Dv:(h + 1) * Dv] = jnp.dot(
            A.astype(jnp.bfloat16), Vh,
            preferred_element_type=jnp.float32).astype(jnp.bfloat16)

    # ---- out_projection ----
    out_ref[0] = (jnp.dot(o_scr[...], wo_ref[...],
                          preferred_element_type=jnp.float32)
                  + bo_ref[...]).astype(out_ref.dtype)


def attention_layer_forward(queries, keys, values, params, num_heads, *, q_tile=None):
    """Pallas implementation of AttentionLayer.forward (attn_mask=None, eval mode)."""
    B, L, d_model = queries.shape
    _, S, _ = keys.shape
    wq, bq, wk, bk, wv, bv, wo, bo = params
    d_k = wq.shape[1]
    d_v = wv.shape[1]
    E = d_k // num_heads
    scale = 1.0 / float(np.sqrt(E))

    # Query-tile size: largest power-of-two divisor of L up to 256.  Bigger tiles
    # amortize per-grid-step overhead; 256 keeps (TQ, S) f32 score tiles and the
    # double-buffered attn-map output block small even on v7x (64 MiB VMEM).
    if q_tile is None:
        q_tile = next((t for t in (256, 128, 64, 32, 16, 8, 4, 2, 1) if L % t == 0), L)
    assert L % q_tile == 0
    n_q_tiles = L // q_tile

    # bf16 MXU operands (accumulation stays f32 inside the kernel); biases stay f32.
    wq_bf = wq.astype(jnp.bfloat16)
    wk_bf = wk.astype(jnp.bfloat16)
    wv_bf = wv.astype(jnp.bfloat16)
    wo_bf = wo.astype(jnp.bfloat16)

    bq2 = bq.reshape(1, -1)
    bk2 = bk.reshape(1, -1)
    bv2 = bv.reshape(1, -1)
    bo2 = bo.reshape(1, -1)

    kernel = functools.partial(_attention_layer_kernel,
                               num_heads=num_heads, scale=scale)

    def const_spec(arr):
        nd = arr.ndim
        return pl.BlockSpec(arr.shape, lambda b, lq, _nd=nd: (0,) * _nd)

    in_specs = [
        pl.BlockSpec((1, q_tile, d_model), lambda b, lq: (b, lq, 0)),   # queries (L-tiled)
        pl.BlockSpec((1, S, d_model), lambda b, lq: (b, 0, 0)),         # keys (per batch)
        pl.BlockSpec((1, S, d_model), lambda b, lq: (b, 0, 0)),         # values (per batch)
        const_spec(wq_bf), const_spec(bq2),
        const_spec(wk_bf), const_spec(bk2),
        const_spec(wv_bf), const_spec(bv2),
        const_spec(wo_bf), const_spec(bo2),
    ]
    out_specs = (
        pl.BlockSpec((1, q_tile, d_model), lambda b, lq: (b, lq, 0)),
        pl.BlockSpec((1, num_heads, q_tile, S), lambda b, lq: (b, 0, lq, 0)),
    )
    out_shape = (
        jax.ShapeDtypeStruct((B, L, d_model), jnp.float32),
        jax.ShapeDtypeStruct((B, num_heads, L, S), jnp.float32),
    )
    scratch_shapes = [
        pltpu.VMEM((S, d_k), jnp.bfloat16),       # projected K (persists across L tiles)
        pltpu.VMEM((S, d_v), jnp.bfloat16),       # projected V (persists across L tiles)
        pltpu.VMEM((q_tile, d_v), jnp.bfloat16),  # concatenated head outputs (O slab)
    ]

    fn = pl.pallas_call(
        kernel,
        out_shape=out_shape,
        grid=(B, n_q_tiles),
        in_specs=in_specs,
        out_specs=out_specs,
        scratch_shapes=scratch_shapes,
        compiler_params=pltpu.CompilerParams(
            # batch: parallel (megacore); L-tiles: arbitrary, because the K/V scratch
            # is filled at the first tile of each batch and reused afterwards.
            dimension_semantics=("parallel", "arbitrary")),
    )
    return fn(queries, keys, values,
              wq_bf, bq2, wk_bf, bk2, wv_bf, bv2, wo_bf, bo2)


def _reference_forward(queries, keys, values, params, num_heads):
    """Pure-JAX f32 reference mirroring the PyTorch forward (FullAttention inner)."""
    wq, bq, wk, bk, wv, bv, wo, bo = params
    B, L, _ = queries.shape
    _, S, _ = values.shape
    H = num_heads
    Q = (queries @ wq + bq).reshape(B, L, H, -1)
    K = (keys @ wk + bk).reshape(B, S, H, -1)
    V = (values @ wv + bv).reshape(B, S, H, -1)
    E = Q.shape[-1]
    scale = 1.0 / np.sqrt(E)
    scores = jnp.einsum("blhe,bshe->bhls", Q, K)
    A = jax.nn.softmax(scale * scores, axis=-1)
    out = jnp.einsum("bhls,bshd->blhd", A, V).reshape(B, L, -1)
    return out @ wo + bo, A


def _init_params(key, d_model, num_heads):
    d_k = d_model // num_heads
    d_v = d_model // num_heads
    ks = jax.random.split(key, 8)
    mk = lambda k, shape, fan_in: (jax.random.uniform(k, shape, jnp.float32, -1.0, 1.0)
                                   / np.sqrt(fan_in))
    wq = mk(ks[0], (d_model, d_k), d_model)
    bq = mk(ks[1], (d_k,), d_model)
    wk = mk(ks[2], (d_model, d_k), d_model)
    bk = mk(ks[3], (d_k,), d_model)
    wv = mk(ks[4], (d_model, d_v), d_model)
    bv = mk(ks[5], (d_v,), d_model)
    wo = mk(ks[6], (d_v * num_heads, d_model), d_v * num_heads)
    bo = mk(ks[7], (d_model,), d_v * num_heads)
    return (wq, bq, wk, bk, wv, bv, wo, bo)


if __name__ == "__main__":
    # num_heads=1 is the only head count for which the reference module's
    # out_projection (Linear(d_v * num_heads, d_model)) is shape-consistent.
    # d_model=128 and L=S=256 keep every block lane-dense; the default q_tile (256)
    # is overridden to 128 here to exercise the multi-tile (pipelined) path.
    B, L, S, d_model, num_heads = 2, 256, 256, 128, 1

    root = jax.random.PRNGKey(0)
    k_q, k_k, k_v, k_p = jax.random.split(root, 4)
    queries = jax.random.normal(k_q, (B, L, d_model), jnp.float32)
    keys = jax.random.normal(k_k, (B, S, d_model), jnp.float32)
    values = jax.random.normal(k_v, (B, S, d_model), jnp.float32)
    params = _init_params(k_p, d_model, num_heads)

    out, attn = attention_layer_forward(queries, keys, values, params, num_heads,
                                        q_tile=128)
    out = jax.block_until_ready(out)
    attn = jax.block_until_ready(attn)

    ref_out, ref_attn = _reference_forward(queries, keys, values, params, num_heads)
    # bf16 MXU operands + approximate reciprocal => loosened tolerances vs f32 reference.
    if not np.allclose(np.asarray(out), np.asarray(ref_out), atol=2e-2, rtol=2e-2):
        raise AssertionError("output mismatch vs reference")
    if not np.allclose(np.asarray(attn), np.asarray(ref_attn), atol=5e-3, rtol=2e-2):
        raise AssertionError("attention-map mismatch vs reference")

    print("KERNEL_OK")
</pallas_src>

<mosaic_0001>
module attributes {stable_mosaic.version = 11 : i64} {
  func.func @_attention_layer_kernel(%arg0: i32, %arg1: i32, %arg2: memref<1x128x128xf32, #tpu.memory_space<vmem>>, %arg3: memref<1x256x128xf32, #tpu.memory_space<vmem>>, %arg4: memref<1x256x128xf32, #tpu.memory_space<vmem>>, %arg5: memref<128x128xbf16, #tpu.memory_space<vmem>>, %arg6: memref<1x128xf32, #tpu.memory_space<vmem>>, %arg7: memref<128x128xbf16, #tpu.memory_space<vmem>>, %arg8: memref<1x128xf32, #tpu.memory_space<vmem>>, %arg9: memref<128x128xbf16, #tpu.memory_space<vmem>>, %arg10: memref<1x128xf32, #tpu.memory_space<vmem>>, %arg11: memref<128x128xbf16, #tpu.memory_space<vmem>>, %arg12: memref<1x128xf32, #tpu.memory_space<vmem>>, %arg13: memref<1x128x128xf32, #tpu.memory_space<vmem>>, %arg14: memref<1x1x128x256xf32, #tpu.memory_space<vmem>>, %arg15: memref<256x128xbf16, #tpu.memory_space<vmem>>, %arg16: memref<256x128xbf16, #tpu.memory_space<vmem>>, %arg17: memref<128x128xbf16, #tpu.memory_space<vmem>>) attributes {dimension_semantics = [#tpu.dimension_semantics<parallel>, #tpu.dimension_semantics<arbitrary>], iteration_bounds = array<i64: 2, 2>, scalar_prefetch = 0 : i64, scratch_operands = 3 : i64, tpu.core_type = #tpu.core_type<tc>, window_params = [{transform_indices = @transform_0, window_bounds = array<i64: 1, 128, 128>}, {transform_indices = @transform_1, window_bounds = array<i64: 1, 256, 128>}, {transform_indices = @transform_2, window_bounds = array<i64: 1, 256, 128>}, {pipeline_mode = #tpu.pipeline_mode<synchronous>, transform_indices = @transform_3, window_bounds = array<i64: 128, 128>}, {pipeline_mode = #tpu.pipeline_mode<synchronous>, transform_indices = @transform_4, window_bounds = array<i64: 1, 128>}, {pipeline_mode = #tpu.pipeline_mode<synchronous>, transform_indices = @transform_5, window_bounds = array<i64: 128, 128>}, {pipeline_mode = #tpu.pipeline_mode<synchronous>, transform_indices = @transform_6, window_bounds = array<i64: 1, 128>}, {pipeline_mode = #tpu.pipeline_mode<synchronous>, transform_indices = @transform_7, window_bounds = array<i64: 128, 128>}, {pipeline_mode = #tpu.pipeline_mode<synchronous>, transform_indices = @transform_8, window_bounds = array<i64: 1, 128>}, {pipeline_mode = #tpu.pipeline_mode<synchronous>, transform_indices = @transform_9, window_bounds = array<i64: 128, 128>}, {pipeline_mode = #tpu.pipeline_mode<synchronous>, transform_indices = @transform_10, window_bounds = array<i64: 1, 128>}, {transform_indices = @transform_11, window_bounds = array<i64: 1, 128, 128>}, {transform_indices = @transform_12, window_bounds = array<i64: 1, 1, 128, 256>}]} {
    %c0_i32 = arith.constant 0 : i32
    %0 = arith.cmpi eq, %arg1, %c0_i32 : i32
    %1 = arith.extui %0 : i1 to i32
    %c0_i32_0 = arith.constant 0 : i32
    %2 = arith.cmpi ne, %1, %c0_i32_0 : i32
    scf.if %2 {
      %c0_32 = arith.constant 0 : index
      %c0_33 = arith.constant 0 : index
      %c0_34 = arith.constant 0 : index
      %43 = vector.load %arg3[%c0_32, %c0_33, %c0_34] : memref<1x256x128xf32, #tpu.memory_space<vmem>>, vector<1x256x128xf32>
      %44 = vector.shape_cast %43 : vector<1x256x128xf32> to vector<256x128xf32>
      %45 = arith.truncf %44 : vector<256x128xf32> to vector<256x128xbf16>
      %c0_35 = arith.constant 0 : index
      %c0_36 = arith.constant 0 : index
      %c0_37 = arith.constant 0 : index
      %46 = vector.load %arg4[%c0_35, %c0_36, %c0_37] : memref<1x256x128xf32, #tpu.memory_space<vmem>>, vector<1x256x128xf32>
      %47 = vector.shape_cast %46 : vector<1x256x128xf32> to vector<256x128xf32>
      %48 = arith.truncf %47 : vector<256x128xf32> to vector<256x128xbf16>
      %c0_38 = arith.constant 0 : index
      %c0_39 = arith.constant 0 : index
      %49 = vector.load %arg7[%c0_38, %c0_39] : memref<128x128xbf16, #tpu.memory_space<vmem>>, vector<128x128xbf16>
      %cst_40 = arith.constant dense<0.000000e+00> : vector<256x128xf32>
      %50 = tpu.matmul %45, %49, %cst_40 {dimension_numbers = #tpu.dot_dimension_numbers<[1], [0], [0], [1], [0, 0, 1, 1], [], []>} : vector<256x128xbf16>, vector<128x128xbf16>, vector<256x128xf32> -> vector<256x128xf32>
      %c0_41 = arith.constant 0 : index
      %c0_42 = arith.constant 0 : index
      %51 = vector.load %arg8[%c0_41, %c0_42] : memref<1x128xf32, #tpu.memory_space<vmem>>, vector<1x128xf32>
      %52 = vector.broadcast %51 : vector<1x128xf32> to vector<256x128xf32>
      %53 = arith.addf %50, %52 : vector<256x128xf32>
      %c0_43 = arith.constant 0 : index
      %c0_44 = arith.constant 0 : index
      %54 = vector.load %arg9[%c0_43, %c0_44] : memref<128x128xbf16, #tpu.memory_space<vmem>>, vector<128x128xbf16>
      %cst_45 = arith.constant dense<0.000000e+00> : vector<256x128xf32>
      %55 = tpu.matmul %48, %54, %cst_45 {dimension_numbers = #tpu.dot_dimension_numbers<[1], [0], [0], [1], [0, 0, 1, 1], [], []>} : vector<256x128xbf16>, vector<128x128xbf16>, vector<256x128xf32> -> vector<256x128xf32>
      %c0_46 = arith.constant 0 : index
      %c0_47 = arith.constant 0 : index
      %56 = vector.load %arg10[%c0_46, %c0_47] : memref<1x128xf32, #tpu.memory_space<vmem>>, vector<1x128xf32>
      %57 = vector.broadcast %56 : vector<1x128xf32> to vector<256x128xf32>
      %58 = arith.addf %55, %57 : vector<256x128xf32>
      %59 = arith.truncf %53 : vector<256x128xf32> to vector<256x128xbf16>
      %c0_48 = arith.constant 0 : index
      %c0_49 = arith.constant 0 : index
      %60 = vector.load %arg15[%c0_48, %c0_49] : memref<256x128xbf16, #tpu.memory_space<vmem>>, vector<256x128xbf16>
      tpu.vector_store %arg15[%c0_48, %c0_49], %59 {strides = array<i32>} : memref<256x128xbf16, #tpu.memory_space<vmem>>, vector<256x128xbf16>,
      %61 = arith.truncf %58 : vector<256x128xf32> to vector<256x128xbf16>
      %c0_50 = arith.constant 0 : index
      %c0_51 = arith.constant 0 : index
      %62 = vector.load %arg16[%c0_50, %c0_51] : memref<256x128xbf16, #tpu.memory_space<vmem>>, vector<256x128xbf16>
      tpu.vector_store %arg16[%c0_50, %c0_51], %61 {strides = array<i32>} : memref<256x128xbf16, #tpu.memory_space<vmem>>, vector<256x128xbf16>,
    } else {
    }
    %c0 = arith.constant 0 : index
    %c0_1 = arith.constant 0 : index
    %c0_2 = arith.constant 0 : index
    %3 = vector.load %arg2[%c0, %c0_1, %c0_2] : memref<1x128x128xf32, #tpu.memory_space<vmem>>, vector<1x128x128xf32>
    %4 = vector.shape_cast %3 : vector<1x128x128xf32> to vector<128x128xf32>
    %5 = arith.truncf %4 : vector<128x128xf32> to vector<128x128xbf16>
    %c0_3 = arith.constant 0 : index
    %c0_4 = arith.constant 0 : index
    %6 = vector.load %arg5[%c0_3, %c0_4] : memref<128x128xbf16, #tpu.memory_space<vmem>>, vector<128x128xbf16>
    %cst = arith.constant dense<0.000000e+00> : vector<128x128xf32>
    %7 = tpu.matmul %5, %6, %cst {dimension_numbers = #tpu.dot_dimension_numbers<[1], [0], [0], [1], [0, 0, 1, 1], [], []>} : vector<128x128xbf16>, vector<128x128xbf16>, vector<128x128xf32> -> vector<128x128xf32>
    %c0_5 = arith.constant 0 : index
    %c0_6 = arith.constant 0 : index
    %8 = vector.load %arg6[%c0_5, %c0_6] : memref<1x128xf32, #tpu.memory_space<vmem>>, vector<1x128xf32>
    %9 = vector.broadcast %8 : vector<1x128xf32> to vector<128x128xf32>
    %10 = arith.addf %7, %9 : vector<128x128xf32>
    %cst_7 = arith.constant 0.0883883461 : f32
    %11 = vector.broadcast %cst_7 : f32 to vector<128x128xf32>
    %12 = arith.mulf %10, %11 : vector<128x128xf32>
    %13 = arith.truncf %12 : vector<128x128xf32> to vector<128x128xbf16>
    %c0_8 = arith.constant 0 : index
    %c0_9 = arith.constant 0 : index
    %14 = vector.load %arg15[%c0_8, %c0_9] : memref<256x128xbf16, #tpu.memory_space<vmem>>, vector<256x128xbf16>
    %c0_10 = arith.constant 0 : index
    %c0_11 = arith.constant 0 : index
    %15 = vector.load %arg16[%c0_10, %c0_11] : memref<256x128xbf16, #tpu.memory_space<vmem>>, vector<256x128xbf16>
    %cst_12 = arith.constant dense<0.000000e+00> : vector<128x256xf32>
    %16 = tpu.matmul %13, %14, %cst_12 {dimension_numbers = #tpu.dot_dimension_numbers<[1], [1], [0], [0], [0, 0, 1, 0], [], []>} : vector<128x128xbf16>, vector<256x128xbf16>, vector<128x256xf32> -> vector<128x256xf32>
    %cst_13 = arith.constant dense<0xFF800000> : vector<128xf32>
    %17 = vector.multi_reduction <maximumf>, %16, %cst_13 [1] : vector<128x256xf32> to vector<128xf32>
    %18 = vector.shape_cast %17 : vector<128xf32> to vector<128x1xf32>
    %19 = vector.broadcast %18 : vector<128x1xf32> to vector<128x256xf32>
    %20 = arith.subf %16, %19 : vector<128x256xf32>
    %21 = math.exp %20 : vector<128x256xf32>
    %cst_14 = arith.constant dense<0.000000e+00> : vector<128xf32>
    %22 = vector.multi_reduction <add>, %21, %cst_14 [1] : vector<128x256xf32> to vector<128xf32>
    %23 = vector.shape_cast %22 : vector<128xf32> to vector<128x1xf32>
    %24 = tpu.reciprocal %23 {approx = true} : vector<128x1xf32> -> vector<128x1xf32>
    %25 = vector.broadcast %24 : vector<128x1xf32> to vector<128x256xf32>
    %26 = arith.mulf %21, %25 : vector<128x256xf32>
    %c0_15 = arith.constant 0 : index
    %c0_16 = arith.constant 0 : index
    %c0_17 = arith.constant 0 : index
    %c0_18 = arith.constant 0 : index
    %27 = vector.load %arg14[%c0_15, %c0_16, %c0_17, %c0_18] : memref<1x1x128x256xf32, #tpu.memory_space<vmem>>, vector<1x1x128x256xf32>
    %28 = vector.shape_cast %27 : vector<1x1x128x256xf32> to vector<128x256xf32>
    %29 = vector.shape_cast %26 : vector<128x256xf32> to vector<1x1x128x256xf32>
    tpu.vector_store %arg14[%c0_15, %c0_16, %c0_17, %c0_18], %29 {strides = array<i32>} : memref<1x1x128x256xf32, #tpu.memory_space<vmem>>, vector<1x1x128x256xf32>,
    %30 = arith.truncf %26 : vector<128x256xf32> to vector<128x256xbf16>
    %cst_19 = arith.constant dense<0.000000e+00> : vector<128x128xf32>
    %31 = tpu.matmul %30, %15, %cst_19 {dimension_numbers = #tpu.dot_dimension_numbers<[1], [0], [0], [1], [0, 0, 1, 1], [], []>} : vector<128x256xbf16>, vector<256x128xbf16>, vector<128x128xf32> -> vector<128x128xf32>
    %32 = arith.truncf %31 : vector<128x128xf32> to vector<128x128xbf16>
    %c0_20 = arith.constant 0 : index
    %c0_21 = arith.constant 0 : index
    %33 = vector.load %arg17[%c0_20, %c0_21] : memref<128x128xbf16, #tpu.memory_space<vmem>>, vector<128x128xbf16>
    tpu.vector_store %arg17[%c0_20, %c0_21], %32 {strides = array<i32>} : memref<128x128xbf16, #tpu.memory_space<vmem>>, vector<128x128xbf16>,
    %c0_22 = arith.constant 0 : index
    %c0_23 = arith.constant 0 : index
    %34 = vector.load %arg17[%c0_22, %c0_23] : memref<128x128xbf16, #tpu.memory_space<vmem>>, vector<128x128xbf16>
    %c0_24 = arith.constant 0 : index
    %c0_25 = arith.constant 0 : index
    %35 = vector.load %arg11[%c0_24, %c0_25] : memref<128x128xbf16, #tpu.memory_space<vmem>>, vector<128x128xbf16>
    %cst_26 = arith.constant dense<0.000000e+00> : vector<128x128xf32>
    %36 = tpu.matmul %34, %35, %cst_26 {dimension_numbers = #tpu.dot_dimension_numbers<[1], [0], [0], [1], [0, 0, 1, 1], [], []>} : vector<128x128xbf16>, vector<128x128xbf16>, vector<128x128xf32> -> vector<128x128xf32>
    %c0_27 = arith.constant 0 : index
    %c0_28 = arith.constant 0 : index
    %37 = vector.load %arg12[%c0_27, %c0_28] : memref<1x128xf32, #tpu.memory_space<vmem>>, vector<1x128xf32>
    %38 = vector.broadcast %37 : vector<1x128xf32> to vector<128x128xf32>
    %39 = arith.addf %36, %38 : vector<128x128xf32>
    %c0_29 = arith.constant 0 : index
    %c0_30 = arith.constant 0 : index
    %c0_31 = arith.constant 0 : index
    %40 = vector.load %arg13[%c0_29, %c0_30, %c0_31] : memref<1x128x128xf32, #tpu.memory_space<vmem>>, vector<1x128x128xf32>
    %41 = vector.shape_cast %40 : vector<1x128x128xf32> to vector<128x128xf32>
    %42 = vector.shape_cast %39 : vector<128x128xf32> to vector<1x128x128xf32>
    tpu.vector_store %arg13[%c0_29, %c0_30, %c0_31], %42 {strides = array<i32>} : memref<1x128x128xf32, #tpu.memory_space<vmem>>, vector<1x128x128xf32>,
    return
  }
  func.func @transform_0(%arg0: i32, %arg1: i32) -> (i32, i32, i32) {
    %c0_i32 = arith.constant 0 : i32
    %c0_i32_0 = arith.constant 0 : i32
    return %arg0, %arg1, %c0_i32 : i32, i32, i32
  }
  func.func @transform_1(%arg0: i32, %arg1: i32) -> (i32, i32, i32) {
    %c0_i32 = arith.constant 0 : i32
    %c0_i32_0 = arith.constant 0 : i32
    %c0_i32_1 = arith.constant 0 : i32
    return %arg0, %c0_i32, %c0_i32_0 : i32, i32, i32
  }
  func.func @transform_2(%arg0: i32, %arg1: i32) -> (i32, i32, i32) {
    %c0_i32 = arith.constant 0 : i32
    %c0_i32_0 = arith.constant 0 : i32
    %c0_i32_1 = arith.constant 0 : i32
    return %arg0, %c0_i32, %c0_i32_0 : i32, i32, i32
  }
  func.func @transform_3(%arg0: i32, %arg1: i32) -> (i32, i32) {
    %c0_i32 = arith.constant 0 : i32
    %c0_i32_0 = arith.constant 0 : i32
    %c0_i32_1 = arith.constant 0 : i32
    return %c0_i32, %c0_i32_0 : i32, i32
  }
  func.func @transform_4(%arg0: i32, %arg1: i32) -> (i32, i32) {
    %c0_i32 = arith.constant 0 : i32
    %c0_i32_0 = arith.constant 0 : i32
    %c0_i32_1 = arith.constant 0 : i32
    return %c0_i32, %c0_i32_0 : i32, i32
  }
  func.func @transform_5(%arg0: i32, %arg1: i32) -> (i32, i32) {
    %c0_i32 = arith.constant 0 : i32
    %c0_i32_0 = arith.constant 0 : i32
    %c0_i32_1 = arith.constant 0 : i32
    return %c0_i32, %c0_i32_0 : i32, i32
  }
  func.func @transform_6(%arg0: i32, %arg1: i32) -> (i32, i32) {
    %c0_i32 = arith.constant 0 : i32
    %c0_i32_0 = arith.constant 0 : i32
    %c0_i32_1 = arith.constant 0 : i32
    return %c0_i32, %c0_i32_0 : i32, i32
  }
  func.func @transform_7(%arg0: i32, %arg1: i32) -> (i32, i32) {
    %c0_i32 = arith.constant 0 : i32
    %c0_i32_0 = arith.constant 0 : i32
    %c0_i32_1 = arith.constant 0 : i32
    return %c0_i32, %c0_i32_0 : i32, i32
  }
  func.func @transform_8(%arg0: i32, %arg1: i32) -> (i32, i32) {
    %c0_i32 = arith.constant 0 : i32
    %c0_i32_0 = arith.constant 0 : i32
    %c0_i32_1 = arith.constant 0 : i32
    return %c0_i32, %c0_i32_0 : i32, i32
  }
  func.func @transform_9(%arg0: i32, %arg1: i32) -> (i32, i32) {
    %c0_i32 = arith.constant 0 : i32
    %c0_i32_0 = arith.constant 0 : i32
    %c0_i32_1 = arith.constant 0 : i32
    return %c0_i32, %c0_i32_0 : i32, i32
  }
  func.func @transform_10(%arg0: i32, %arg1: i32) -> (i32, i32) {
    %c0_i32 = arith.constant 0 : i32
    %c0_i32_0 = arith.constant 0 : i32
    %c0_i32_1 = arith.constant 0 : i32
    return %c0_i32, %c0_i32_0 : i32, i32
  }
  func.func @transform_11(%arg0: i32, %arg1: i32) -> (i32, i32, i32) {
    %c0_i32 = arith.constant 0 : i32
    %c0_i32_0 = arith.constant 0 : i32
    return %arg0, %arg1, %c0_i32 : i32, i32, i32
  }
  func.func @transform_12(%arg0: i32, %arg1: i32) -> (i32, i32, i32, i32) {
    %c0_i32 = arith.constant 0 : i32
    %c0_i32_0 = arith.constant 0 : i32
    %c0_i32_1 = arith.constant 0 : i32
    return %arg0, %c0_i32, %arg1, %c0_i32_0 : i32, i32, i32, i32
  }
}

</mosaic_0001>

<llo_original>
// kernel: tpu_custom_call.1
$region0: #{tpu_custom_call.1}
  #allocation0 [shape = 'u32[]', space=smem, size = 0x4, offset = 0x4, fixed_abs, tag = 'smem constant byte address 0x4 - core index']
  #allocation1 [shape = 'u32[144,128]{1,0:T(1,128)}', space=vmem, size = 0x12000, scoped, tag = 'internal scratch']
  #allocation2 [shape = 'bf16[256,128]{1,0:T(16,128)(2,1)}', space=vmem, size = 0x10000, scoped, tag = 'scratch operand']
  #allocation3 [shape = 'bf16[256,128]{1,0:T(16,128)(2,1)}', space=vmem, size = 0x10000, scoped, tag = 'scratch operand']
  #allocation4 [shape = 'bf16[128,128]{1,0:T(16,128)(2,1)}', space=vmem, size = 0x8000, scoped, tag = 'scratch operand']
  %s0 = inlined_call_operand.hbm [shape: f32[2,256,128], index: 0, kind: input, shape index: {}]
  %s1 = inlined_call_operand.hbm [shape: f32[2,256,128], index: 1, kind: input, shape index: {}]
  %s2 = inlined_call_operand.hbm [shape: f32[2,256,128], index: 2, kind: input, shape index: {}]
  %s3 = inlined_call_operand.hbm [shape: bf16[128,128], index: 3, kind: input, shape index: {}]
  %s4 = inlined_call_operand.vmem [shape: f32[1,128], index: 4, kind: input, shape index: {}]
  %s5 = inlined_call_operand.hbm [shape: bf16[128,128], index: 5, kind: input, shape index: {}]
  %s6 = inlined_call_operand.vmem [shape: f32[1,128], index: 6, kind: input, shape index: {}]
  %s7 = inlined_call_operand.hbm [shape: bf16[128,128], index: 7, kind: input, shape index: {}]
  %s8 = inlined_call_operand.vmem [shape: f32[1,128], index: 8, kind: input, shape index: {}]
  %s9 = inlined_call_operand.hbm [shape: bf16[128,128], index: 9, kind: input, shape index: {}]
  %s10 = inlined_call_operand.vmem [shape: f32[1,128], index: 10, kind: input, shape index: {}]
  %s11 = inlined_call_operand.hbm [shape: f32[2,256,128], index: 11, kind: output, shape index: {0}]
  %s12 = inlined_call_operand.hbm [shape: f32[2,1,256,256], index: 12, kind: output, shape index: {1}]
  %13 = xla_tuple %s11, %s12
  %s14 = sld [smem:[#allocation0]]
  $region117: #{tpu_custom_call.1} parent=0
    _
  %s16 = ssub.s32 1, %s14
  %s17 = scalar_select 0, %s16, %s14
  $region1: #{tpu_custom_call.1} parent=0
    #allocation5 [shape = 'u8[131072]{0}', space=vmem, size = 0x20000, scoped, tag = 'input window, operand 0']
    #allocation6 [shape = 's32[2]{0}', space=sflag, size = 0x8, scoped, tag = 'scoped memory for tpu_custom_call.1']
    #allocation7 [shape = 's32[2]{0}', space=sflag, size = 0x8, scoped, tag = 'scoped memory for tpu_custom_call.1']
    #allocation8 [shape = 'u8[262144]{0}', space=vmem, size = 0x40000, scoped, tag = 'input window, operand 1']
    #allocation9 [shape = 's32[2]{0}', space=sflag, size = 0x8, scoped, tag = 'scoped memory for tpu_custom_call.1']
    #allocation10 [shape = 'u8[262144]{0}', space=vmem, size = 0x40000, scoped, tag = 'input window, operand 2']
    #allocation11 [shape = 'u8[32768]{0}', space=vmem, size = 0x8000, scoped, tag = 'input window, operand 3, single buffered']
    #allocation12 [shape = 's32[1]{0}', space=sflag, size = 0x4, scoped, tag = 'scoped memory for tpu_custom_call.1']
    #allocation13 [shape = 'u8[32768]{0}', space=vmem, size = 0x8000, scoped, tag = 'input window, operand 5, single buffered']
    #allocation14 [shape = 'u8[32768]{0}', space=vmem, size = 0x8000, scoped, tag = 'input window, operand 7, single buffered']
    #allocation15 [shape = 's32[1]{0}', space=sflag, size = 0x4, scoped, tag = 'scoped memory for tpu_custom_call.1']
    #allocation16 [shape = 'u8[32768]{0}', space=vmem, size = 0x8000, scoped, tag = 'input window, operand 9, single buffered']
    #allocation17 [shape = 'u8[131072]{0}', space=vmem, size = 0x20000, scoped, tag = 'output window, operand 0']
    #allocation18 [shape = 'u8[262144]{0}', space=vmem, size = 0x40000, scoped, tag = 'output window, operand 1']
    #allocation19 [shape = 's32[2]{0}', space=sflag, size = 0x8, scoped, tag = 'scoped memory for tpu_custom_call.1']
    %18 = vsyncpa [#allocation6], 0
    %s19 = scalar_lea.sflag [#allocation6], 1
    %20 = vsyncpa %s19, 0
    %21 = vsyncpa [#allocation9], 0
    %s22 = scalar_lea.sflag [#allocation9], 1
    %23 = vsyncpa %s22, 0
    %24 = vsyncpa [#allocation12], 0
    %25 = vsyncpa [#allocation15], 0
    %26 = vsyncpa [#allocation7], 0
    %s27 = scalar_lea.sflag [#allocation7], 1
    %28 = vsyncpa %s27, 0
    %29 = vsyncpa [#allocation19], 0
    %s30 = scalar_lea.sflag [#allocation19], 1
    %31 = vsyncpa %s30, 0
    loop: start=0, step=1, limit=6
    $region2: #{tpu_custom_call.1} parent=1 // loop_pre_header
      _
    $region3: #{tpu_custom_call.1} parent=1 // loop_header
      %s33 = sphi 0, %s37
      %p34 = scmp.ge.s32.totalorder %s33, 6
      %s40 = sphi 0, %s52
      %s41 = sphi 0, %s48
      %s42 = sphi 0, %s40
      %s43 = sphi 0, %s41
      %s44 = sphi 0, %s42
      %s45 = sphi 0, %s43
      %s57 = sphi 0, %s59
      %s60 = sphi 0, %s57
      %s61 = sphi 0, %s60
      %s77 = sphi 0, %s61
      %s83 = sphi 0, %s85
      %s86 = sphi 0, %s83
      %s87 = sphi 0, %s86
      %s103 = sphi 0, %s87
      %s109 = sphi 0, %s111
      %s112 = sphi 0, %s109
      %s113 = sphi 0, %s112
      %s129 = sphi 0, %s113
      %s133 = sphi 0, %s133
      %s135 = sphi 0, %s133
      %s136 = sphi 0, %s135
      %s150 = sphi 0, %s136
      %s154 = sphi 0, %s154
      %s156 = sphi 0, %s154
      %s157 = sphi 0, %s156
      %s171 = sphi 0, %s157
      %s175 = sphi 0, %s175
      %s177 = sphi 0, %s175
      %s178 = sphi 0, %s177
      %s192 = sphi 0, %s178
      %s196 = sphi 0, %s196
      %s198 = sphi 0, %s196
      %s199 = sphi 0, %s198
      %s213 = sphi 0, %s199
      %s217 = sphi 0, %s217
      %s219 = sphi 0, %s217
      %s220 = sphi 0, %s219
      %s234 = sphi 0, %s220
      %s238 = sphi 0, %s238
      %s240 = sphi 0, %s238
      %s241 = sphi 0, %s240
      %s255 = sphi 0, %s241
      %s259 = sphi 0, %s259
      %s261 = sphi 0, %s259
      %s262 = sphi 0, %s261
      %s276 = sphi 0, %s262
      %s280 = sphi 0, %s280
      %s282 = sphi 0, %s280
      %s283 = sphi 0, %s282
      %s297 = sphi 0, %s283
      %s305 = sphi 0, %s307
      %s308 = sphi 0, %s305
      %s309 = sphi 0, %s308
      %s325 = sphi 0, %s309
      %s333 = sphi 0, %s335
      %s336 = sphi 0, %s333
      %s337 = sphi 0, %s336
      %s353 = sphi 0, %s337
    $region4: #{tpu_custom_call.1} parent=1 // loop_header_branch
      %36 = sbr.rel (%p34) target = $region8
    $region5: #{tpu_custom_call.1} parent=1 // loop_body
      %s38 = ssub.s32 %s33, 1
      %s39 = ssub.s32 %s33, 2
      %s46 = sadd.s32 1, %s41
      %p47 = scmp.ge.s32.totalorder %s46, 2
      %s48 = scalar_select %p47, 0, %s46
      %s49 = sadd.s32 1, %s40
      %s50 = scalar_select %p47, %s49, %s40
      %p51 = scmp.ge.s32.totalorder %s50, 2
      %s52 = scalar_select %p51, 0, %s50
      %s53 = ssub.s32 %s40, %s52
      %s54 = ssub.s32 %s41, %s48
      %s55 = sor.u32 %s53, %s54
      %p56 = scmp.eq.s32.totalorder %s55, 0
      %s58 = sadd.s32 %s57, 1
      %s59 = scalar_select %p56, %s57, %s58
      %p62 = pneg %p56
      %p63 = scmp.eq.s32.totalorder %s33, 3
      %p64 = por %p62, %p63
      %p65 = scmp.ne.s32.totalorder %s57, %s60
      %p66 = scmp.eq.s32.totalorder %s33, 0
      %p67 = por %p65, %p66
      %p68 = scmp.ne.s32.totalorder %s57, %s60
      %p69 = scmp.eq.s32.totalorder %s38, 3
      %p70 = por %p68, %p69
      %p71 = scmp.ne.s32.totalorder %s60, %s61
      %p72 = scmp.eq.s32.totalorder %s38, 0
      %p73 = por %p71, %p72
      %p74 = scmp.ne.s32.totalorder %s60, %s61
      %p75 = scmp.eq.s32.totalorder %s39, 3
      %p76 = por %p74, %p75
      %p78 = scmp.ne.s32.totalorder %s61, %s77
      %p79 = scmp.eq.s32.totalorder %s39, 0
      %p80 = por %p78, %p79
      %s81 = ssub.s32 %s40, %s52
      %p82 = scmp.eq.s32.totalorder %s81, 0
      %s84 = sadd.s32 %s83, 1
      %s85 = scalar_select %p82, %s83, %s84
      %p88 = pneg %p82
      %p89 = scmp.eq.s32.totalorder %s33, 3
      %p90 = por %p88, %p89
      %p91 = scmp.ne.s32.totalorder %s83, %s86
      %p92 = scmp.eq.s32.totalorder %s33, 0
      %p93 = por %p91, %p92
      %p94 = scmp.ne.s32.totalorder %s83, %s86
      %p95 = scmp.eq.s32.totalorder %s38, 3
      %p96 = por %p94, %p95
      %p97 = scmp.ne.s32.totalorder %s86, %s87
      %p98 = scmp.eq.s32.totalorder %s38, 0
      %p99 = por %p97, %p98
      %p100 = scmp.ne.s32.totalorder %s86, %s87
      %p101 = scmp.eq.s32.totalorder %s39, 3
      %p102 = por %p100, %p101
      %p104 = scmp.ne.s32.totalorder %s87, %s103
      %p105 = scmp.eq.s32.totalorder %s39, 0
      %p106 = por %p104, %p105
      %s107 = ssub.s32 %s40, %s52
      %p108 = scmp.eq.s32.totalorder %s107, 0
      %s110 = sadd.s32 %s109, 1
      %s111 = scalar_select %p108, %s109, %s110
      %p114 = pneg %p108
      %p115 = scmp.eq.s32.totalorder %s33, 3
      %p116 = por %p114, %p115
      %p117 = scmp.ne.s32.totalorder %s109, %s112
      %p118 = scmp.eq.s32.totalorder %s33, 0
      %p119 = por %p117, %p118
      %p120 = scmp.ne.s32.totalorder %s109, %s112
      %p121 = scmp.eq.s32.totalorder %s38, 3
      %p122 = por %p120, %p121
      %p123 = scmp.ne.s32.totalorder %s112, %s113
      %p124 = scmp.eq.s32.totalorder %s38, 0
      %p125 = por %p123, %p124
      %p126 = scmp.ne.s32.totalorder %s112, %s113
      %p127 = scmp.eq.s32.totalorder %s39, 3
      %p128 = por %p126, %p127
      %p130 = scmp.ne.s32.totalorder %s113, %s129
      %p131 = scmp.eq.s32.totalorder %s39, 0
      %p132 = por %p130, %p131
      %s134 = sadd.s32 %s133, 1
      %p137 = scmp.eq.s32.totalorder %s33, 3
      %p138 = scmp.ne.s32.totalorder %s133, %s135
      %p139 = scmp.eq.s32.totalorder %s33, 0
      %p140 = por %p138, %p139
      %p141 = scmp.ne.s32.totalorder %s133, %s135
      %p142 = scmp.eq.s32.totalorder %s38, 3
      %p143 = por %p141, %p142
      %p144 = scmp.ne.s32.totalorder %s135, %s136
      %p145 = scmp.eq.s32.totalorder %s38, 0
      %p146 = por %p144, %p145
      %p147 = scmp.ne.s32.totalorder %s135, %s136
      %p148 = scmp.eq.s32.totalorder %s39, 3
      %p149 = por %p147, %p148
      %p151 = scmp.ne.s32.totalorder %s136, %s150
      %p152 = scmp.eq.s32.totalorder %s39, 0
      %p153 = por %p151, %p152
      %s155 = sadd.s32 %s154, 1
      %p158 = scmp.eq.s32.totalorder %s33, 3
      %p159 = scmp.ne.s32.totalorder %s154, %s156
      %p160 = scmp.eq.s32.totalorder %s33, 0
      %p161 = por %p159, %p160
      %p162 = scmp.ne.s32.totalorder %s154, %s156
      %p163 = scmp.eq.s32.totalorder %s38, 3
      %p164 = por %p162, %p163
      %p165 = scmp.ne.s32.totalorder %s156, %s157
      %p166 = scmp.eq.s32.totalorder %s38, 0
      %p167 = por %p165, %p166
      %p168 = scmp.ne.s32.totalorder %s156, %s157
      %p169 = scmp.eq.s32.totalorder %s39, 3
      %p170 = por %p168, %p169
      %p172 = scmp.ne.s32.totalorder %s157, %s171
      %p173 = scmp.eq.s32.totalorder %s39, 0
      %p174 = por %p172, %p173
      %s176 = sadd.s32 %s175, 1
      %p179 = scmp.eq.s32.totalorder %s33, 3
      %p180 = scmp.ne.s32.totalorder %s175, %s177
      %p181 = scmp.eq.s32.totalorder %s33, 0
      %p182 = por %p180, %p181
      %p183 = scmp.ne.s32.totalorder %s175, %s177
      %p184 = scmp.eq.s32.totalorder %s38, 3
      %p185 = por %p183, %p184
      %p186 = scmp.ne.s32.totalorder %s177, %s178
      %p187 = scmp.eq.s32.totalorder %s38, 0
      %p188 = por %p186, %p187
      %p189 = scmp.ne.s32.totalorder %s177, %s178
      %p190 = scmp.eq.s32.totalorder %s39, 3
      %p191 = por %p189, %p190
      %p193 = scmp.ne.s32.totalorder %s178, %s192
      %p194 = scmp.eq.s32.totalorder %s39, 0
      %p195 = por %p193, %p194
      %s197 = sadd.s32 %s196, 1
      %p200 = scmp.eq.s32.totalorder %s33, 3
      %p201 = scmp.ne.s32.totalorder %s196, %s198
      %p202 = scmp.eq.s32.totalorder %s33, 0
      %p203 = por %p201, %p202
      %p204 = scmp.ne.s32.totalorder %s196, %s198
      %p205 = scmp.eq.s32.totalorder %s38, 3
      %p206 = por %p204, %p205
      %p207 = scmp.ne.s32.totalorder %s198, %s199
      %p208 = scmp.eq.s32.totalorder %s38, 0
      %p209 = por %p207, %p208
      %p210 = scmp.ne.s32.totalorder %s198, %s199
      %p211 = scmp.eq.s32.totalorder %s39, 3
      %p212 = por %p210, %p211
      %p214 = scmp.ne.s32.totalorder %s199, %s213
      %p215 = scmp.eq.s32.totalorder %s39, 0
      %p216 = por %p214, %p215
      %s218 = sadd.s32 %s217, 1
      %p221 = scmp.eq.s32.totalorder %s33, 3
      %p222 = scmp.ne.s32.totalorder %s217, %s219
      %p223 = scmp.eq.s32.totalorder %s33, 0
      %p224 = por %p222, %p223
      %p225 = scmp.ne.s32.totalorder %s217, %s219
      %p226 = scmp.eq.s32.totalorder %s38, 3
      %p227 = por %p225, %p226
      %p228 = scmp.ne.s32.totalorder %s219, %s220
      %p229 = scmp.eq.s32.totalorder %s38, 0
      %p230 = por %p228, %p229
      %p231 = scmp.ne.s32.totalorder %s219, %s220
      %p232 = scmp.eq.s32.totalorder %s39, 3
      %p233 = por %p231, %p232
      %p235 = scmp.ne.s32.totalorder %s220, %s234
      %p236 = scmp.eq.s32.totalorder %s39, 0
      %p237 = por %p235, %p236
      %s239 = sadd.s32 %s238, 1
      %p242 = scmp.eq.s32.totalorder %s33, 3
      %p243 = scmp.ne.s32.totalorder %s238, %s240
      %p244 = scmp.eq.s32.totalorder %s33, 0
      %p245 = por %p243, %p244
      %p246 = scmp.ne.s32.totalorder %s238, %s240
      %p247 = scmp.eq.s32.totalorder %s38, 3
      %p248 = por %p246, %p247
      %p249 = scmp.ne.s32.totalorder %s240, %s241
      %p250 = scmp.eq.s32.totalorder %s38, 0
      %p251 = por %p249, %p250
      %p252 = scmp.ne.s32.totalorder %s240, %s241
      %p253 = scmp.eq.s32.totalorder %s39, 3
      %p254 = por %p252, %p253
      %p256 = scmp.ne.s32.totalorder %s241, %s255
      %p257 = scmp.eq.s32.totalorder %s39, 0
      %p258 = por %p256, %p257
      %s260 = sadd.s32 %s259, 1
      %p263 = scmp.eq.s32.totalorder %s33, 3
      %p264 = scmp.ne.s32.totalorder %s259, %s261
      %p265 = scmp.eq.s32.totalorder %s33, 0
      %p266 = por %p264, %p265
      %p267 = scmp.ne.s32.totalorder %s259, %s261
      %p268 = scmp.eq.s32.totalorder %s38, 3
      %p269 = por %p267, %p268
      %p270 = scmp.ne.s32.totalorder %s261, %s262
      %p271 = scmp.eq.s32.totalorder %s38, 0
      %p272 = por %p270, %p271
      %p273 = scmp.ne.s32.totalorder %s261, %s262
      %p274 = scmp.eq.s32.totalorder %s39, 3
      %p275 = por %p273, %p274
      %p277 = scmp.ne.s32.totalorder %s262, %s276
      %p278 = scmp.eq.s32.totalorder %s39, 0
      %p279 = por %p277, %p278
      %s281 = sadd.s32 %s280, 1
      %p284 = scmp.eq.s32.totalorder %s33, 3
      %p285 = scmp.ne.s32.totalorder %s280, %s282
      %p286 = scmp.eq.s32.totalorder %s33, 0
      %p287 = por %p285, %p286
      %p288 = scmp.ne.s32.totalorder %s280, %s282
      %p289 = scmp.eq.s32.totalorder %s38, 3
      %p290 = por %p288, %p289
      %p291 = scmp.ne.s32.totalorder %s282, %s283
      %p292 = scmp.eq.s32.totalorder %s38, 0
      %p293 = por %p291, %p292
      %p294 = scmp.ne.s32.totalorder %s282, %s283
      %p295 = scmp.eq.s32.totalorder %s39, 3
      %p296 = por %p294, %p295
      %p298 = scmp.ne.s32.totalorder %s283, %s297
      %p299 = scmp.eq.s32.totalorder %s39, 0
      %p300 = por %p298, %p299
      %s301 = ssub.s32 %s40, %s52
      %s302 = ssub.s32 %s41, %s48
      %s303 = sor.u32 %s301, %s302
      %p304 = scmp.eq.s32.totalorder %s303, 0
      %s306 = sadd.s32 %s305, 1
      %s307 = scalar_select %p304, %s305, %s306
      %p310 = pneg %p304
      %p311 = scmp.eq.s32.totalorder %s33, 3
      %p312 = por %p310, %p311
      %p313 = scmp.ne.s32.totalorder %s305, %s308
      %p314 = scmp.eq.s32.totalorder %s33, 0
      %p315 = por %p313, %p314
      %p316 = scmp.ne.s32.totalorder %s305, %s308
      %p317 = scmp.eq.s32.totalorder %s38, 3
      %p318 = por %p316, %p317
      %p319 = scmp.ne.s32.totalorder %s308, %s309
      %p320 = scmp.eq.s32.totalorder %s38, 0
      %p321 = por %p319, %p320
      %p322 = scmp.ne.s32.totalorder %s308, %s309
      %p323 = scmp.eq.s32.totalorder %s39, 3
      %p324 = por %p322, %p323
      %p326 = scmp.ne.s32.totalorder %s309, %s325
      %p327 = scmp.eq.s32.totalorder %s39, 0
      %p328 = por %p326, %p327
      %s329 = ssub.s32 %s40, %s52
      %s330 = ssub.s32 %s41, %s48
      %s331 = sor.u32 %s329, %s330
      %p332 = scmp.eq.s32.totalorder %s331, 0
      %s334 = sadd.s32 %s333, 1
      %s335 = scalar_select %p332, %s333, %s334
      %p338 = pneg %p332
      %p339 = scmp.eq.s32.totalorder %s33, 3
      %p340 = por %p338, %p339
      %p341 = scmp.ne.s32.totalorder %s333, %s336
      %p342 = scmp.eq.s32.totalorder %s33, 0
      %p343 = por %p341, %p342
      %p344 = scmp.ne.s32.totalorder %s333, %s336
      %p345 = scmp.eq.s32.totalorder %s38, 3
      %p346 = por %p344, %p345
      %p347 = scmp.ne.s32.totalorder %s336, %s337
      %p348 = scmp.eq.s32.totalorder %s38, 0
      %p349 = por %p347, %p348
      %p350 = scmp.ne.s32.totalorder %s336, %s337
      %p351 = scmp.eq.s32.totalorder %s39, 3
      %p352 = por %p350, %p351
      %p354 = scmp.ne.s32.totalorder %s337, %s353
      %p355 = scmp.eq.s32.totalorder %s39, 0
      %p356 = por %p354, %p355
      %p357 = scmp.le.s32.totalorder 1, %s33
      %p358 = scmp.lt.s32.totalorder %s33, 5
      %p359 = pnand %p357, %p358
      %p360 = pneg %p359
      // Predicated region
      $region9: #{tpu_custom_call.1} parent=5 // pred_check
        _
      $region10: #{tpu_custom_call.1} parent=5 // pred_check_branch
        %362 = sbr.rel (%p359) target = $region12
      $region11: #{tpu_custom_call.1} parent=5 // pred_region
        %s363 = ssub.s32 %s33, 1
        // Predicated region
        $region13: #{tpu_custom_call.1} parent=11 // pred_check
          %p364 = pneg %p146
        $region14: #{tpu_custom_call.1} parent=11 // pred_check_branch
          %366 = sbr.rel (%p364) target = $region16
        $region15: #{tpu_custom_call.1} parent=11 // pred_region
          %s368 = ssub.s32 1024, 1024
          %369 = vsyncadd [#allocation12], %s368
          %s370 = sshll.u32 [#allocation11], 4
          %s371 = int_to_ptr.vmem [resolvable:$true] %s370
          %376 = dma.hbm_to_vmem [thread:$0]  %s3, 1024, %s371, [#allocation12], 64, 64, 4
        $region16: #{tpu_custom_call.1} parent=11 // pred_fallthru
          _
        // Predicated region
        $region17: #{tpu_custom_call.1} parent=11 // pred_check
          %p377 = pneg %p167
        $region18: #{tpu_custom_call.1} parent=11 // pred_check_branch
          %379 = sbr.rel (%p377) target = $region20
        $region19: #{tpu_custom_call.1} parent=11 // pred_region
          _
        $region20: #{tpu_custom_call.1} parent=11 // pred_fallthru
          _
        // Predicated region
        $region21: #{tpu_custom_call.1} parent=11 // pred_check
          %p380 = pneg %p188
        $region22: #{tpu_custom_call.1} parent=11 // pred_check_branch
          %382 = sbr.rel (%p380) target = $region24
        $region23: #{tpu_custom_call.1} parent=11 // pred_region
          %s384 = ssub.s32 1024, 1024
          %385 = vsyncadd [#allocation12], %s384
          %s386 = sshll.u32 [#allocation13], 4
          %s387 = int_to_ptr.vmem [resolvable:$true] %s386
          %392 = dma.hbm_to_vmem [thread:$0]  %s5, 1024, %s387, [#allocation12], 64, 64, 4
        $region24: #{tpu_custom_call.1} parent=11 // pred_fallthru
          _
        // Predicated region
        $region25: #{tpu_custom_call.1} parent=11 // pred_check
          %p393 = pneg %p209
        $region26: #{tpu_custom_call.1} parent=11 // pred_check_branch
          %395 = sbr.rel (%p393) target = $region28
        $region27: #{tpu_custom_call.1} parent=11 // pred_region
          _
        $region28: #{tpu_custom_call.1} parent=11 // pred_fallthru
          _
        // Predicated region
        $region29: #{tpu_custom_call.1} parent=11 // pred_check
          %p396 = pneg %p230
        $region30: #{tpu_custom_call.1} parent=11 // pred_check_branch
          %398 = sbr.rel (%p396) target = $region32
        $region31: #{tpu_custom_call.1} parent=11 // pred_region
          %s400 = ssub.s32 1024, 1024
          %401 = vsyncadd [#allocation15], %s400
          %s402 = sshll.u32 [#allocation14], 4
          %s403 = int_to_ptr.vmem [resolvable:$true] %s402
          %408 = dma.hbm_to_vmem [thread:$0]  %s7, 1024, %s403, [#allocation15], 64, 64, 4
        $region32: #{tpu_custom_call.1} parent=11 // pred_fallthru
          _
        // Predicated region
        $region33: #{tpu_custom_call.1} parent=11 // pred_check
          %p409 = pneg %p251
        $region34: #{tpu_custom_call.1} parent=11 // pred_check_branch
          %411 = sbr.rel (%p409) target = $region36
        $region35: #{tpu_custom_call.1} parent=11 // pred_region
          _
        $region36: #{tpu_custom_call.1} parent=11 // pred_fallthru
          _
        // Predicated region
        $region37: #{tpu_custom_call.1} parent=11 // pred_check
          %p412 = pneg %p272
        $region38: #{tpu_custom_call.1} parent=11 // pred_check_branch
          %414 = sbr.rel (%p412) target = $region40
        $region39: #{tpu_custom_call.1} parent=11 // pred_region
          %s416 = ssub.s32 1024, 1024
          %417 = vsyncadd [#allocation15], %s416
          %s418 = sshll.u32 [#allocation16], 4
          %s419 = int_to_ptr.vmem [resolvable:$true] %s418
          %424 = dma.hbm_to_vmem [thread:$0]  %s9, 1024, %s419, [#allocation15], 64, 64, 4
        $region40: #{tpu_custom_call.1} parent=11 // pred_fallthru
          _
        // Predicated region
        $region41: #{tpu_custom_call.1} parent=11 // pred_check
          %p425 = pneg %p293
        $region42: #{tpu_custom_call.1} parent=11 // pred_check_branch
          %427 = sbr.rel (%p425) target = $region44
        $region43: #{tpu_custom_call.1} parent=11 // pred_region
          _
        $region44: #{tpu_custom_call.1} parent=11 // pred_fallthru
          _
      $region12: #{tpu_custom_call.1} parent=5 // pred_fallthru
        _
      %p428 = scmp.lt.s32.totalorder %s33, 4
      // Predicated region
      $region45: #{tpu_custom_call.1} parent=5 // pred_check
        %p429 = pneg %p428
      $region46: #{tpu_custom_call.1} parent=5 // pred_check_branch
        %431 = sbr.rel (%p429) target = $region48
      $region47: #{tpu_custom_call.1} parent=5 // pred_region
        // Predicated region
        $region49: #{tpu_custom_call.1} parent=47 // pred_check
          %p432 = pneg %p67
        $region50: #{tpu_custom_call.1} parent=47 // pred_check_branch
          %434 = sbr.rel (%p432) target = $region52
        $region51: #{tpu_custom_call.1} parent=47 // pred_region
          %s435 = sand.u32 %s57, 1
          %s436 = scalar_lea.sflag [#allocation6], %s435
          %s437 = sand.u32 %s57, 1
          %s438 = smul.addr %s437, 128
          %s439 = scalar_lea.vmem [#allocation5], %s438
          %s440 = smul.u32 16, %s41
          %s442 = ssub.s32 2048, 2048
          %443 = vsyncadd %s436, %s442
          %s444 = smul.addr %s40, 32
          %s445 = sadd.s32 %s440, %s444
          %s446 = smul.addr %s445, 128
          %s447 = scalar_lea.hbm %s0, %s446
          %s448 = sshll.u32 %s439, 4
          %s449 = int_to_ptr.vmem [resolvable:$true] %s448
          %454 = dma.hbm_to_vmem [thread:$0]  %s447, 2048, %s449, %s436, 128, 128, 8
        $region52: #{tpu_custom_call.1} parent=47 // pred_fallthru
          _
        // Predicated region
        $region53: #{tpu_custom_call.1} parent=47 // pred_check
          %p455 = pneg %p93
        $region54: #{tpu_custom_call.1} parent=47 // pred_check_branch
          %457 = sbr.rel (%p455) target = $region56
        $region55: #{tpu_custom_call.1} parent=47 // pred_region
          %s458 = sand.u32 %s33, 1
          %s459 = scalar_lea.sflag [#allocation9], %s458
          %s460 = sand.u32 %s83, 1
          %s461 = smul.addr %s460, 256
          %s462 = scalar_lea.vmem [#allocation8], %s461
          %s464 = ssub.s32 4096, 4096
          %465 = vsyncadd %s459, %s464
          %s466 = smul.addr %s40, 32
          %s467 = smul.addr %s466, 128
          %s468 = scalar_lea.hbm %s1, %s467
          %s469 = sshll.u32 %s462, 4
          %s470 = int_to_ptr.vmem [resolvable:$true] %s469
          %475 = dma.hbm_to_vmem [thread:$0]  %s468, 4096, %s470, %s459, 128, 128, 8
        $region56: #{tpu_custom_call.1} parent=47 // pred_fallthru
          _
        // Predicated region
        $region57: #{tpu_custom_call.1} parent=47 // pred_check
          %p476 = pneg %p119
        $region58: #{tpu_custom_call.1} parent=47 // pred_check_branch
          %478 = sbr.rel (%p476) target = $region60
        $region59: #{tpu_custom_call.1} parent=47 // pred_region
          %s479 = sand.u32 %s33, 1
          %s480 = scalar_lea.sflag [#allocation9], %s479
          %s481 = sand.u32 %s109, 1
          %s482 = smul.addr %s481, 256
          %s483 = scalar_lea.vmem [#allocation10], %s482
          %s485 = ssub.s32 4096, 4096
          %486 = vsyncadd %s480, %s485
          %s487 = smul.addr %s40, 32
          %s488 = smul.addr %s487, 128
          %s489 = scalar_lea.hbm %s2, %s488
          %s490 = sshll.u32 %s483, 4
          %s491 = int_to_ptr.vmem [resolvable:$true] %s490
          %496 = dma.hbm_to_vmem [thread:$0]  %s489, 4096, %s491, %s480, 128, 128, 8
        $region60: #{tpu_custom_call.1} parent=47 // pred_fallthru
          _
      $region48: #{tpu_custom_call.1} parent=5 // pred_fallthru
        _
      %p497 = scmp.le.s32.totalorder 1, %s33
      %p498 = scmp.lt.s32.totalorder %s33, 5
      %p499 = pnand %p497, %p498
      %p500 = pneg %p499
      // Predicated region
      $region61: #{tpu_custom_call.1} parent=5 // pred_check
        _
      $region62: #{tpu_custom_call.1} parent=5 // pred_check_branch
        %502 = sbr.rel (%p499) target = $region64
      $region63: #{tpu_custom_call.1} parent=5 // pred_region
        %s503 = ssub.s32 %s33, 1
        %s504 = sand.u32 %s60, 1
        %s505 = scalar_lea.sflag [#allocation6], %s504
        %s506 = sand.u32 %s60, 1
        %s507 = smul.addr %s506, 128
        %s508 = scalar_lea.vmem [#allocation5], %s507
        // Predicated region
        $region65: #{tpu_custom_call.1} parent=63 // pred_check
          %p509 = pneg %p73
        $region66: #{tpu_custom_call.1} parent=63 // pred_check_branch
          %511 = sbr.rel (%p509) target = $region68
        $region67: #{tpu_custom_call.1} parent=63 // pred_region
          %512 = dma.done %s505, 2048
        $region68: #{tpu_custom_call.1} parent=63 // pred_fallthru
          _
        %s513 = sand.u32 %s38, 1
        %s514 = scalar_lea.sflag [#allocation9], %s513
        %s515 = sand.u32 %s86, 1
        %s516 = smul.addr %s515, 256
        %s517 = scalar_lea.vmem [#allocation8], %s516
        // Predicated region
        $region69: #{tpu_custom_call.1} parent=63 // pred_check
          %p518 = pneg %p99
        $region70: #{tpu_custom_call.1} parent=63 // pred_check_branch
          %520 = sbr.rel (%p518) target = $region72
        $region71: #{tpu_custom_call.1} parent=63 // pred_region
          %521 = dma.done %s514, 4096
        $region72: #{tpu_custom_call.1} parent=63 // pred_fallthru
          _
        %s522 = sand.u32 %s38, 1
        %s523 = scalar_lea.sflag [#allocation9], %s522
        %s524 = sand.u32 %s112, 1
        %s525 = smul.addr %s524, 256
        %s526 = scalar_lea.vmem [#allocation10], %s525
        // Predicated region
        $region73: #{tpu_custom_call.1} parent=63 // pred_check
          %p527 = pneg %p125
        $region74: #{tpu_custom_call.1} parent=63 // pred_check_branch
          %529 = sbr.rel (%p527) target = $region76
        $region75: #{tpu_custom_call.1} parent=63 // pred_region
          %530 = dma.done %s523, 4096
        $region76: #{tpu_custom_call.1} parent=63 // pred_fallthru
          _
        // Predicated region
        $region77: #{tpu_custom_call.1} parent=63 // pred_check
          %p531 = pneg %p146
        $region78: #{tpu_custom_call.1} parent=63 // pred_check_branch
          %533 = sbr.rel (%p531) target = $region80
        $region79: #{tpu_custom_call.1} parent=63 // pred_region
          %534 = dma.done [#allocation12], 1024
        $region80: #{tpu_custom_call.1} parent=63 // pred_fallthru
          _
        // Predicated region
        $region81: #{tpu_custom_call.1} parent=63 // pred_check
          %p535 = pneg %p188
        $region82: #{tpu_custom_call.1} parent=63 // pred_check_branch
          %537 = sbr.rel (%p535) target = $region84
        $region83: #{tpu_custom_call.1} parent=63 // pred_region
          %538 = dma.done [#allocation12], 1024
        $region84: #{tpu_custom_call.1} parent=63 // pred_fallthru
          _
        // Predicated region
        $region85: #{tpu_custom_call.1} parent=63 // pred_check
          %p539 = pneg %p230
        $region86: #{tpu_custom_call.1} parent=63 // pred_check_branch
          %541 = sbr.rel (%p539) target = $region88
        $region87: #{tpu_custom_call.1} parent=63 // pred_region
          %542 = dma.done [#allocation15], 1024
        $region88: #{tpu_custom_call.1} parent=63 // pred_fallthru
          _
        // Predicated region
        $region89: #{tpu_custom_call.1} parent=63 // pred_check
          %p543 = pneg %p272
        $region90: #{tpu_custom_call.1} parent=63 // pred_check_branch
          %545 = sbr.rel (%p543) target = $region92
        $region91: #{tpu_custom_call.1} parent=63 // pred_region
          %546 = dma.done [#allocation15], 1024
        $region92: #{tpu_custom_call.1} parent=63 // pred_fallthru
          _
        %s547 = sand.u32 %s60, 1
        %s548 = scalar_lea.sflag [#allocation6], %s547
        %s549 = sand.u32 %s60, 1
        %s550 = smul.addr %s549, 128
        %s551 = scalar_lea.vmem [#allocation5], %s550
        %p552 = pneg %p73
        %p553 = pneg %p70
        %s554 = sand.u32 %s38, 1
        %s555 = scalar_lea.sflag [#allocation9], %s554
        %s556 = sand.u32 %s86, 1
        %s557 = smul.addr %s556, 256
        %s558 = scalar_lea.vmem [#allocation8], %s557
        %p559 = pneg %p99
        %p560 = pneg %p96
        %s561 = sand.u32 %s38, 1
        %s562 = scalar_lea.sflag [#allocation9], %s561
        %s563 = sand.u32 %s112, 1
        %s564 = smul.addr %s563, 256
        %s565 = scalar_lea.vmem [#allocation10], %s564
        %p566 = pneg %p125
        %p567 = pneg %p122
        %p568 = pneg %p146
        %p569 = pneg %p143
        %p570 = pneg %p167
        %p571 = pneg %p164
        %p572 = pneg %p188
        %p573 = pneg %p185
        %p574 = pneg %p209
        %p575 = pneg %p206
        %p576 = pneg %p230
        %p577 = pneg %p227
        %p578 = pneg %p251
        %p579 = pneg %p248
        %p580 = pneg %p272
        %p581 = pneg %p269
        %p582 = pneg %p293
        %p583 = pneg %p290
        %p584 = pneg %p321
        %p585 = pneg %p318
        %s586 = sand.u32 %s308, 1
        %s587 = scalar_lea.sflag [#allocation7], %s586
        %s588 = sand.u32 %s308, 1
        %s589 = smul.addr %s588, 128
        %s590 = scalar_lea.vmem [#allocation17], %s589
        %p591 = pneg %p349
        %p592 = pneg %p346
        %s593 = sand.u32 %s336, 1
        %s594 = scalar_lea.sflag [#allocation19], %s593
        %s595 = sand.u32 %s336, 1
        %s596 = smul.addr %s595, 256
        %s597 = scalar_lea.vmem [#allocation18], %s596
        %s598 = smul.u32 16, %s43
        %s599 = smul.u32 16, %s43
        %s600 = smul.u32 16, %s43
        %p602 = scmp.eq.s32.totalorder %s43, 0
        // Predicated region
        $region93: #{tpu_custom_call.1} parent=63 // pred_check
          %p603 = pneg %p602
        $region94: #{tpu_custom_call.1} parent=63 // pred_check_branch
          %605 = sbr.rel (%p603) target = $region96
        $region95: #{tpu_custom_call.1} parent=63 // pred_region
          %v606 = vld [vmem:[%s517] sm:$0xff]
          %v607 = vld [vmem:[%s517 + $0x8] sm:$0xff]
          %v608 = vld [vmem:[%s517 + $0x10] sm:$0xff]
          %v609 = vld [vmem:[%s517 + $0x18] sm:$0xff]
          %v610 = vld [vmem:[%s517 + $0x20] sm:$0xff]
          %v611 = vld [vmem:[%s517 + $0x28] sm:$0xff]
          %v612 = vld [vmem:[%s517 + $0x30] sm:$0xff]
          %v613 = vld [vmem:[%s517 + $0x38] sm:$0xff]
          %v614 = vld [vmem:[%s517 + $0x40] sm:$0xff]
          %v615 = vld [vmem:[%s517 + $0x48] sm:$0xff]
          %v616 = vld [vmem:[%s517 + $0x50] sm:$0xff]
          %v617 = vld [vmem:[%s517 + $0x58] sm:$0xff]
          %v618 = vld [vmem:[%s517 + $0x60] sm:$0xff]
          %v619 = vld [vmem:[%s517 + $0x68] sm:$0xff]
          %v620 = vld [vmem:[%s517 + $0x70] sm:$0xff]
          %v621 = vld [vmem:[%s517 + $0x78] sm:$0xff]
          %v622 = vld [vmem:[%s517 + $0x80] sm:$0xff]
          %v623 = vld [vmem:[%s517 + $0x88] sm:$0xff]
          %v624 = vld [vmem:[%s517 + $0x90] sm:$0xff]
          %v625 = vld [vmem:[%s517 + $0x98] sm:$0xff]
          %v626 = vld [vmem:[%s517 + $0xa0] sm:$0xff]
          %v627 = vld [vmem:[%s517 + $0xa8] sm:$0xff]
          %v628 = vld [vmem:[%s517 + $0xb0] sm:$0xff]
          %v629 = vld [vmem:[%s517 + $0xb8] sm:$0xff]
          %v630 = vld [vmem:[%s517 + $0xc0] sm:$0xff]
          %v631 = vld [vmem:[%s517 + $0xc8] sm:$0xff]
          %v632 = vld [vmem:[%s517 + $0xd0] sm:$0xff]
          %v633 = vld [vmem:[%s517 + $0xd8] sm:$0xff]
          %v634 = vld [vmem:[%s517 + $0xe0] sm:$0xff]
          %v635 = vld [vmem:[%s517 + $0xe8] sm:$0xff]
          %v636 = vld [vmem:[%s517 + $0xf0] sm:$0xff]
          %v637 = vld [vmem:[%s517 + $0xf8] sm:$0xff]
          %v638 = vpack.c.bf16 %v607, %v606
          %v639 = vpack.c.bf16 %v609, %v608
          %v640 = vpack.c.bf16 %v611, %v610
          %v641 = vpack.c.bf16 %v613, %v612
          %v642 = vpack.c.bf16 %v615, %v614
          %v643 = vpack.c.bf16 %v617, %v616
          %v644 = vpack.c.bf16 %v619, %v618
          %v645 = vpack.c.bf16 %v621, %v620
          %v646 = vpack.c.bf16 %v623, %v622
          %v647 = vpack.c.bf16 %v625, %v624
          %v648 = vpack.c.bf16 %v627, %v626
          %v649 = vpack.c.bf16 %v629, %v628
          %v650 = vpack.c.bf16 %v631, %v630
          %v651 = vpack.c.bf16 %v633, %v632
          %v652 = vpack.c.bf16 %v635, %v634
          %v653 = vpack.c.bf16 %v637, %v636
          %v654 = vld [vmem:[%s526] sm:$0xff]
          %v655 = vld [vmem:[%s526 + $0x8] sm:$0xff]
          %v656 = vld [vmem:[%s526 + $0x10] sm:$0xff]
          %v657 = vld [vmem:[%s526 + $0x18] sm:$0xff]
          %v658 = vld [vmem:[%s526 + $0x20] sm:$0xff]
          %v659 = vld [vmem:[%s526 + $0x28] sm:$0xff]
          %v660 = vld [vmem:[%s526 + $0x30] sm:$0xff]
          %v661 = vld [vmem:[%s526 + $0x38] sm:$0xff]
          %v662 = vld [vmem:[%s526 + $0x40] sm:$0xff]
          %v663 = vld [vmem:[%s526 + $0x48] sm:$0xff]
          %v664 = vld [vmem:[%s526 + $0x50] sm:$0xff]
          %v665 = vld [vmem:[%s526 + $0x58] sm:$0xff]
          %v666 = vld [vmem:[%s526 + $0x60] sm:$0xff]
          %v667 = vld [vmem:[%s526 + $0x68] sm:$0xff]
          %v668 = vld [vmem:[%s526 + $0x70] sm:$0xff]
          %v669 = vld [vmem:[%s526 + $0x78] sm:$0xff]
          %v670 = vld [vmem:[%s526 + $0x80] sm:$0xff]
          %v671 = vld [vmem:[%s526 + $0x88] sm:$0xff]
          %v672 = vld [vmem:[%s526 + $0x90] sm:$0xff]
          %v673 = vld [vmem:[%s526 + $0x98] sm:$0xff]
          %v674 = vld [vmem:[%s526 + $0xa0] sm:$0xff]
          %v675 = vld [vmem:[%s526 + $0xa8] sm:$0xff]
          %v676 = vld [vmem:[%s526 + $0xb0] sm:$0xff]
          %v677 = vld [vmem:[%s526 + $0xb8] sm:$0xff]
          %v678 = vld [vmem:[%s526 + $0xc0] sm:$0xff]
          %v679 = vld [vmem:[%s526 + $0xc8] sm:$0xff]
          %v680 = vld [vmem:[%s526 + $0xd0] sm:$0xff]
          %v681 = vld [vmem:[%s526 + $0xd8] sm:$0xff]
          %v682 = vld [vmem:[%s526 + $0xe0] sm:$0xff]
          %v683 = vld [vmem:[%s526 + $0xe8] sm:$0xff]
          %v684 = vld [vmem:[%s526 + $0xf0] sm:$0xff]
          %v685 = vld [vmem:[%s526 + $0xf8] sm:$0xff]
          %v686 = vpack.c.bf16 %v655, %v654
          %v687 = vpack.c.bf16 %v657, %v656
          %v688 = vpack.c.bf16 %v659, %v658
          %v689 = vpack.c.bf16 %v661, %v660
          %v690 = vpack.c.bf16 %v663, %v662
          %v691 = vpack.c.bf16 %v665, %v664
          %v692 = vpack.c.bf16 %v667, %v666
          %v693 = vpack.c.bf16 %v669, %v668
          %v694 = vpack.c.bf16 %v671, %v670
          %v695 = vpack.c.bf16 %v673, %v672
          %v696 = vpack.c.bf16 %v675, %v674
          %v697 = vpack.c.bf16 %v677, %v676
          %v698 = vpack.c.bf16 %v679, %v678
          %v699 = vpack.c.bf16 %v681, %v680
          %v700 = vpack.c.bf16 %v683, %v682
          %v701 = vpack.c.bf16 %v685, %v684
          %v702 = vld [vmem:[#allocation13] sm:$0xf]
          %v703 = vld [vmem:[#allocation13 + $0x4] sm:$0xf]
          %v704 = vld [vmem:[#allocation13 + $0x8] sm:$0xf]
          %v705 = vld [vmem:[#allocation13 + $0xc] sm:$0xf]
          %v706 = vld [vmem:[#allocation13 + $0x10] sm:$0xf]
          %v707 = vld [vmem:[#allocation13 + $0x14] sm:$0xf]
          %v708 = vld [vmem:[#allocation13 + $0x18] sm:$0xf]
          %v709 = vld [vmem:[#allocation13 + $0x1c] sm:$0xf]
          %v710 = vld [vmem:[#allocation13 + $0x20] sm:$0xf]
          %v711 = vld [vmem:[#allocation13 + $0x24] sm:$0xf]
          %v712 = vld [vmem:[#allocation13 + $0x28] sm:$0xf]
          %v713 = vld [vmem:[#allocation13 + $0x2c] sm:$0xf]
          %v714 = vld [vmem:[#allocation13 + $0x30] sm:$0xf]
          %v715 = vld [vmem:[#allocation13 + $0x34] sm:$0xf]
          %v716 = vld [vmem:[#allocation13 + $0x38] sm:$0xf]
          %v717 = vld [vmem:[#allocation13 + $0x3c] sm:$0xf]
          %v718 = vld [vmem:[%s6] sm:$0x1]
          %v720 = vlaneseq
          %v721 = vshrl.u32 %v720, 7
          %v722 = vsub.s32 0, %v721
          %v723 = vrot.slane %v718, %v722
          %v741 = vunpack.c.l.b16 %v702
          %v742 = vunpack.c.l.b16 %v703
          %v743 = vunpack.c.l.b16 %v704
          %v744 = vunpack.c.l.b16 %v705
          %v745 = vunpack.c.l.b16 %v706
          %v746 = vunpack.c.l.b16 %v707
          %v747 = vunpack.c.l.b16 %v708
          %v748 = vunpack.c.l.b16 %v709
          %v749 = vunpack.c.l.b16 %v710
          %v750 = vunpack.c.l.b16 %v711
          %v751 = vunpack.c.l.b16 %v712
          %v752 = vunpack.c.l.b16 %v713
          %v753 = vunpack.c.l.b16 %v714
          %v754 = vunpack.c.l.b16 %v715
          %v755 = vunpack.c.l.b16 %v716
          %v756 = vunpack.c.l.b16 %v717
          %v757 = vpack.c.b16 %v742, %v741
          %v758 = vpack.c.b16 %v744, %v743
          %v759 = vpack.c.b16 %v746, %v745
          %v760 = vpack.c.b16 %v748, %v747
          %v761 = vpack.c.b16 %v750, %v749
          %v762 = vpack.c.b16 %v752, %v751
          %v763 = vpack.c.b16 %v754, %v753
          %v764 = vpack.c.b16 %v756, %v755
          %773 = vmatprep.subr.bf16.mxu0 0
          %774 = vmatpush1.bf16.msra.mxu0 %v757
          %775 = vmatprep.subr.bf16.mxu0 0
          %776 = vmatpush1.bf16.msra.mxu0 %v758
          %777 = vmatprep.subr.bf16.mxu0 0
          %778 = vmatpush1.bf16.msra.mxu0 %v759
          %779 = vmatprep.subr.bf16.mxu0 0
          %780 = vmatpush1.bf16.msra.mxu0 %v760
          %781 = vmatprep.subr.bf16.mxu0 0
          %782 = vmatpush1.bf16.msra.mxu0 %v761
          %783 = vmatprep.subr.bf16.mxu0 0
          %784 = vmatpush1.bf16.msra.mxu0 %v762
          %785 = vmatprep.subr.bf16.mxu0 0
          %786 = vmatpush1.bf16.msra.mxu0 %v763
          %787 = vmatprep.subr.bf16.mxu0 0
          %788 = vmatpush1.bf16.msra.mxu0 %v764
          %789 = vmatprep.subr.bf16.mxu0 0
          %790 = vmatpush1.bf16.msra.mxu0 0
          %791 = vmatprep.subr.bf16.mxu0 0
          %792 = vmatpush1.bf16.msra.mxu0 0
          %793 = vmatprep.subr.bf16.mxu0 0
          %794 = vmatpush1.bf16.msra.mxu0 0
          %795 = vmatprep.subr.bf16.mxu0 0
          %796 = vmatpush1.bf16.msra.mxu0 0
          %797 = vmatprep.subr.bf16.mxu0 0
          %798 = vmatpush1.bf16.msra.mxu0 0
          %799 = vmatprep.subr.bf16.mxu0 0
          %800 = vmatpush1.bf16.msra.mxu0 0
          %801 = vmatprep.subr.bf16.mxu0 0
          %802 = vmatpush1.bf16.msra.mxu0 0
          %803 = vmatprep.subr.bf16.mxu0 0
          %804 = vmatpush1.bf16.msra.mxu0 0
          %805 = vmatprep.mubr.bf16.mxu0 0
          %806 = vmatmul.mubr.bf16.gmra.mrb[0].mxu0 %v638
          %v807 = vpop.f32.mrb[0].mxu0
          %v808 = vadd.f32 %v723, %v807
          %v809 = vpop.f32.mrb[0].mxu0
          %v810 = vpop.f32.mrb[0].mxu0
          %v811 = vadd.f32 %v723, %v810
          %v812 = vpop.f32.mrb[0].mxu0
          %813 = vmatprep.mubr.bf16.mxu0 0
          %814 = vmatmul.mubr.bf16.gmra.mrb[0].mxu0 %v639
          %v815 = vpop.f32.mrb[0].mxu0
          %v816 = vadd.f32 %v723, %v815
          %v817 = vpop.f32.mrb[0].mxu0
          %v818 = vpop.f32.mrb[0].mxu0
          %v819 = vadd.f32 %v723, %v818
          %v820 = vpop.f32.mrb[0].mxu0
          %821 = vmatprep.mubr.bf16.mxu0 0
          %822 = vmatmul.mubr.bf16.gmra.mrb[0].mxu0 %v640
          %v823 = vpop.f32.mrb[0].mxu0
          %v824 = vadd.f32 %v723, %v823
          %v825 = vpop.f32.mrb[0].mxu0
          %v826 = vpop.f32.mrb[0].mxu0
          %v827 = vadd.f32 %v723, %v826
          %v828 = vpop.f32.mrb[0].mxu0
          %829 = vmatprep.mubr.bf16.mxu0 0
          %830 = vmatmul.mubr.bf16.gmra.mrb[0].mxu0 %v641
          %v831 = vpop.f32.mrb[0].mxu0
          %v832 = vadd.f32 %v723, %v831
          %v833 = vpop.f32.mrb[0].mxu0
          %v834 = vpop.f32.mrb[0].mxu0
          %v835 = vadd.f32 %v723, %v834
          %v836 = vpop.f32.mrb[0].mxu0
          %837 = vmatprep.mubr.bf16.mxu0 0
          %838 = vmatmul.mubr.bf16.gmra.mrb[0].mxu0 %v642
          %v839 = vpop.f32.mrb[0].mxu0
          %v840 = vadd.f32 %v723, %v839
          %v841 = vpop.f32.mrb[0].mxu0
          %v842 = vpop.f32.mrb[0].mxu0
          %v843 = vadd.f32 %v723, %v842
          %v844 = vpop.f32.mrb[0].mxu0
          %845 = vmatprep.mubr.bf16.mxu0 0
          %846 = vmatmul.mubr.bf16.gmra.mrb[0].mxu0 %v643
          %v847 = vpop.f32.mrb[0].mxu0
          %v848 = vadd.f32 %v723, %v847
          %v849 = vpop.f32.mrb[0].mxu0
          %v850 = vpop.f32.mrb[0].mxu0
          %v851 = vadd.f32 %v723, %v850
          %v852 = vpop.f32.mrb[0].mxu0
          %853 = vmatprep.mubr.bf16.mxu0 0
          %854 = vmatmul.mubr.bf16.gmra.mrb[0].mxu0 %v644
          %v855 = vpop.f32.mrb[0].mxu0
          %v856 = vadd.f32 %v723, %v855
          %v857 = vpop.f32.mrb[0].mxu0
          %v858 = vpop.f32.mrb[0].mxu0
          %v859 = vadd.f32 %v723, %v858
          %v860 = vpop.f32.mrb[0].mxu0
          %861 = vmatprep.mubr.bf16.mxu0 0
          %862 = vmatmul.mubr.bf16.gmra.mrb[0].mxu0 %v645
          %v863 = vpop.f32.mrb[0].mxu0
          %v864 = vadd.f32 %v723, %v863
          %v865 = vpop.f32.mrb[0].mxu0
          %v866 = vpop.f32.mrb[0].mxu0
          %v867 = vadd.f32 %v723, %v866
          %v868 = vpop.f32.mrb[0].mxu0
          %869 = vmatprep.mubr.bf16.mxu0 0
          %870 = vmatmul.mubr.bf16.gmra.mrb[0].mxu0 %v646
          %v871 = vpop.f32.mrb[0].mxu0
          %v872 = vadd.f32 %v723, %v871
          %v873 = vpop.f32.mrb[0].mxu0
          %v874 = vpop.f32.mrb[0].mxu0
          %v875 = vadd.f32 %v723, %v874
          %v876 = vpop.f32.mrb[0].mxu0
          %877 = vmatprep.mubr.bf16.mxu0 0
          %878 = vmatmul.mubr.bf16.gmra.mrb[0].mxu0 %v647
          %v879 = vpop.f32.mrb[0].mxu0
          %v880 = vadd.f32 %v723, %v879
          %v881 = vpop.f32.mrb[0].mxu0
          %v882 = vpop.f32.mrb[0].mxu0
          %v883 = vadd.f32 %v723, %v882
          %v884 = vpop.f32.mrb[0].mxu0
          %885 = vmatprep.mubr.bf16.mxu0 0
          %886 = vmatmul.mubr.bf16.gmra.mrb[0].mxu0 %v648
          %v887 = vpop.f32.mrb[0].mxu0
          %v888 = vadd.f32 %v723, %v887
          %v889 = vpop.f32.mrb[0].mxu0
          %v890 = vpop.f32.mrb[0].mxu0
          %v891 = vadd.f32 %v723, %v890
          %v892 = vpop.f32.mrb[0].mxu0
          %893 = vmatprep.mubr.bf16.mxu0 0
          %894 = vmatmul.mubr.bf16.gmra.mrb[0].mxu0 %v649
          %v895 = vpop.f32.mrb[0].mxu0
          %v896 = vadd.f32 %v723, %v895
          %v897 = vpop.f32.mrb[0].mxu0
          %v898 = vpop.f32.mrb[0].mxu0
          %v899 = vadd.f32 %v723, %v898
          %v900 = vpop.f32.mrb[0].mxu0
          %901 = vmatprep.mubr.bf16.mxu0 0
          %902 = vmatmul.mubr.bf16.gmra.mrb[0].mxu0 %v650
          %v903 = vpop.f32.mrb[0].mxu0
          %v904 = vadd.f32 %v723, %v903
          %v905 = vpop.f32.mrb[0].mxu0
          %v906 = vpop.f32.mrb[0].mxu0
          %v907 = vadd.f32 %v723, %v906
          %v908 = vpop.f32.mrb[0].mxu0
          %909 = vmatprep.mubr.bf16.mxu0 0
          %910 = vmatmul.mubr.bf16.gmra.mrb[0].mxu0 %v651
          %v911 = vpop.f32.mrb[0].mxu0
          %v912 = vadd.f32 %v723, %v911
          %v913 = vpop.f32.mrb[0].mxu0
          %v914 = vpop.f32.mrb[0].mxu0
          %v915 = vadd.f32 %v723, %v914
          %v916 = vpop.f32.mrb[0].mxu0
          %917 = vmatprep.mubr.bf16.mxu0 0
          %918 = vmatmul.mubr.bf16.gmra.mrb[0].mxu0 %v652
          %v919 = vpop.f32.mrb[0].mxu0
          %v920 = vadd.f32 %v723, %v919
          %v921 = vpop.f32.mrb[0].mxu0
          %v922 = vpop.f32.mrb[0].mxu0
          %v923 = vadd.f32 %v723, %v922
          %v924 = vpop.f32.mrb[0].mxu0
          %925 = vmatprep.mubr.bf16.mxu0 0
          %926 = vmatmul.mubr.bf16.gmra.mrb[0].mxu0 %v653
          %v927 = vpop.f32.mrb[0].mxu0
          %v928 = vadd.f32 %v723, %v927
          %v929 = vpop.f32.mrb[0].mxu0
          %v930 = vpop.f32.mrb[0].mxu0
          %v931 = vadd.f32 %v723, %v930
          %v932 = vpop.f32.mrb[0].mxu0
          %933 = vdwg.mxu0
          %v934 = vld [vmem:[#allocation14] sm:$0xf]
          %v935 = vld [vmem:[#allocation14 + $0x4] sm:$0xf]
          %v936 = vld [vmem:[#allocation14 + $0x8] sm:$0xf]
          %v937 = vld [vmem:[#allocation14 + $0xc] sm:$0xf]
          %v938 = vld [vmem:[#allocation14 + $0x10] sm:$0xf]
          %v939 = vld [vmem:[#allocation14 + $0x14] sm:$0xf]
          %v940 = vld [vmem:[#allocation14 + $0x18] sm:$0xf]
          %v941 = vld [vmem:[#allocation14 + $0x1c] sm:$0xf]
          %v942 = vld [vmem:[#allocation14 + $0x20] sm:$0xf]
          %v943 = vld [vmem:[#allocation14 + $0x24] sm:$0xf]
          %v944 = vld [vmem:[#allocation14 + $0x28] sm:$0xf]
          %v945 = vld [vmem:[#allocation14 + $0x2c] sm:$0xf]
          %v946 = vld [vmem:[#allocation14 + $0x30] sm:$0xf]
          %v947 = vld [vmem:[#allocation14 + $0x34] sm:$0xf]
          %v948 = vld [vmem:[#allocation14 + $0x38] sm:$0xf]
          %v949 = vld [vmem:[#allocation14 + $0x3c] sm:$0xf]
          %v950 = vld [vmem:[%s8] sm:$0x1]
          %v952 = vlaneseq
          %v953 = vshrl.u32 %v952, 7
          %v954 = vsub.s32 0, %v953
          %v955 = vrot.slane %v950, %v954
          %v973 = vunpack.c.l.b16 %v934
          %v974 = vunpack.c.l.b16 %v935
          %v975 = vunpack.c.l.b16 %v936
          %v976 = vunpack.c.l.b16 %v937
          %v977 = vunpack.c.l.b16 %v938
          %v978 = vunpack.c.l.b16 %v939
          %v979 = vunpack.c.l.b16 %v940
          %v980 = vunpack.c.l.b16 %v941
          %v981 = vunpack.c.l.b16 %v942
          %v982 = vunpack.c.l.b16 %v943
          %v983 = vunpack.c.l.b16 %v944
          %v984 = vunpack.c.l.b16 %v945
          %v985 = vunpack.c.l.b16 %v946
          %v986 = vunpack.c.l.b16 %v947
          %v987 = vunpack.c.l.b16 %v948
          %v988 = vunpack.c.l.b16 %v949
          %v989 = vpack.c.b16 %v974, %v973
          %v990 = vpack.c.b16 %v976, %v975
          %v991 = vpack.c.b16 %v978, %v977
          %v992 = vpack.c.b16 %v980, %v979
          %v993 = vpack.c.b16 %v982, %v981
          %v994 = vpack.c.b16 %v984, %v983
          %v995 = vpack.c.b16 %v986, %v985
          %v996 = vpack.c.b16 %v988, %v987
          %1005 = vmatprep.subr.bf16.mxu0 0
          %1006 = vmatpush1.bf16.msra.mxu0 %v989
          %1007 = vmatprep.subr.bf16.mxu0 0
          %1008 = vmatpush1.bf16.msra.mxu0 %v990
          %1009 = vmatprep.subr.bf16.mxu0 0
          %1010 = vmatpush1.bf16.msra.mxu0 %v991
          %1011 = vmatprep.subr.bf16.mxu0 0
          %1012 = vmatpush1.bf16.msra.mxu0 %v992
          %1013 = vmatprep.subr.bf16.mxu0 0
          %1014 = vmatpush1.bf16.msra.mxu0 %v993
          %1015 = vmatprep.subr.bf16.mxu0 0
          %1016 = vmatpush1.bf16.msra.mxu0 %v994
          %1017 = vmatprep.subr.bf16.mxu0 0
          %1018 = vmatpush1.bf16.msra.mxu0 %v995
          %1019 = vmatprep.subr.bf16.mxu0 0
          %1020 = vmatpush1.bf16.msra.mxu0 %v996
          %1021 = vmatprep.subr.bf16.mxu0 0
          %1022 = vmatpush1.bf16.msra.mxu0 0
          %1023 = vmatprep.subr.bf16.mxu0 0
          %1024 = vmatpush1.bf16.msra.mxu0 0
          %1025 = vmatprep.subr.bf16.mxu0 0
          %1026 = vmatpush1.bf16.msra.mxu0 0
          %1027 = vmatprep.subr.bf16.mxu0 0
          %1028 = vmatpush1.bf16.msra.mxu0 0
          %1029 = vmatprep.subr.bf16.mxu0 0
          %1030 = vmatpush1.bf16.msra.mxu0 0
          %1031 = vmatprep.subr.bf16.mxu0 0
          %1032 = vmatpush1.bf16.msra.mxu0 0
          %1033 = vmatprep.subr.bf16.mxu0 0
          %1034 = vmatpush1.bf16.msra.mxu0 0
          %1035 = vmatprep.subr.bf16.mxu0 0
          %1036 = vmatpush1.bf16.msra.mxu0 0
          %1037 = vmatprep.mubr.bf16.mxu0 0
          %1038 = vmatmul.mubr.bf16.gmra.mrb[0].mxu0 %v686
          %v1039 = vpop.f32.mrb[0].mxu0
          %v1040 = vadd.f32 %v955, %v1039
          %v1041 = vpop.f32.mrb[0].mxu0
          %v1042 = vpop.f32.mrb[0].mxu0
          %v1043 = vadd.f32 %v955, %v1042
          %v1044 = vpop.f32.mrb[0].mxu0
          %1045 = vmatprep.mubr.bf16.mxu0 0
          %1046 = vmatmul.mubr.bf16.gmra.mrb[0].mxu0 %v687
          %v1047 = vpop.f32.mrb[0].mxu0
          %v1048 = vadd.f32 %v955, %v1047
          %v1049 = vpop.f32.mrb[0].mxu0
          %v1050 = vpop.f32.mrb[0].mxu0
          %v1051 = vadd.f32 %v955, %v1050
          %v1052 = vpop.f32.mrb[0].mxu0
          %1053 = vmatprep.mubr.bf16.mxu0 0
          %1054 = vmatmul.mubr.bf16.gmra.mrb[0].mxu0 %v688
          %v1055 = vpop.f32.mrb[0].mxu0
          %v1056 = vadd.f32 %v955, %v1055
          %v1057 = vpop.f32.mrb[0].mxu0
          %v1058 = vpop.f32.mrb[0].mxu0
          %v1059 = vadd.f32 %v955, %v1058
          %v1060 = vpop.f32.mrb[0].mxu0
          %1061 = vmatprep.mubr.bf16.mxu0 0
          %1062 = vmatmul.mubr.bf16.gmra.mrb[0].mxu0 %v689
          %v1063 = vpop.f32.mrb[0].mxu0
          %v1064 = vadd.f32 %v955, %v1063
          %v1065 = vpop.f32.mrb[0].mxu0
          %v1066 = vpop.f32.mrb[0].mxu0
          %v1067 = vadd.f32 %v955, %v1066
          %v1068 = vpop.f32.mrb[0].mxu0
          %1069 = vmatprep.mubr.bf16.mxu0 0
          %1070 = vmatmul.mubr.bf16.gmra.mrb[0].mxu0 %v690
          %v1071 = vpop.f32.mrb[0].mxu0
          %v1072 = vadd.f32 %v955, %v1071
          %v1073 = vpop.f32.mrb[0].mxu0
          %v1074 = vpop.f32.mrb[0].mxu0
          %v1075 = vadd.f32 %v955, %v1074
          %v1076 = vpop.f32.mrb[0].mxu0
          %1077 = vmatprep.mubr.bf16.mxu0 0
          %1078 = vmatmul.mubr.bf16.gmra.mrb[0].mxu0 %v691
          %v1079 = vpop.f32.mrb[0].mxu0
          %v1080 = vadd.f32 %v955, %v1079
          %v1081 = vpop.f32.mrb[0].mxu0
          %v1082 = vpop.f32.mrb[0].mxu0
          %v1083 = vadd.f32 %v955, %v1082
          %v1084 = vpop.f32.mrb[0].mxu0
          %1085 = vmatprep.mubr.bf16.mxu0 0
          %1086 = vmatmul.mubr.bf16.gmra.mrb[0].mxu0 %v692
          %v1087 = vpop.f32.mrb[0].mxu0
          %v1088 = vadd.f32 %v955, %v1087
          %v1089 = vpop.f32.mrb[0].mxu0
          %v1090 = vpop.f32.mrb[0].mxu0
          %v1091 = vadd.f32 %v955, %v1090
          %v1092 = vpop.f32.mrb[0].mxu0
          %1093 = vmatprep.mubr.bf16.mxu0 0
          %1094 = vmatmul.mubr.bf16.gmra.mrb[0].mxu0 %v693
          %v1095 = vpop.f32.mrb[0].mxu0
          %v1096 = vadd.f32 %v955, %v1095
          %v1097 = vpop.f32.mrb[0].mxu0
          %v1098 = vpop.f32.mrb[0].mxu0
          %v1099 = vadd.f32 %v955, %v1098
          %v1100 = vpop.f32.mrb[0].mxu0
          %1101 = vmatprep.mubr.bf16.mxu0 0
          %1102 = vmatmul.mubr.bf16.gmra.mrb[0].mxu0 %v694
          %v1103 = vpop.f32.mrb[0].mxu0
          %v1104 = vadd.f32 %v955, %v1103
          %v1105 = vpop.f32.mrb[0].mxu0
          %v1106 = vpop.f32.mrb[0].mxu0
          %v1107 = vadd.f32 %v955, %v1106
          %v1108 = vpop.f32.mrb[0].mxu0
          %1109 = vmatprep.mubr.bf16.mxu0 0
          %1110 = vmatmul.mubr.bf16.gmra.mrb[0].mxu0 %v695
          %v1111 = vpop.f32.mrb[0].mxu0
          %v1112 = vadd.f32 %v955, %v1111
          %v1113 = vpop.f32.mrb[0].mxu0
          %v1114 = vpop.f32.mrb[0].mxu0
          %v1115 = vadd.f32 %v955, %v1114
          %v1116 = vpop.f32.mrb[0].mxu0
          %1117 = vmatprep.mubr.bf16.mxu0 0
          %1118 = vmatmul.mubr.bf16.gmra.mrb[0].mxu0 %v696
          %v1119 = vpop.f32.mrb[0].mxu0
          %v1120 = vadd.f32 %v955, %v1119
          %v1121 = vpop.f32.mrb[0].mxu0
          %v1122 = vpop.f32.mrb[0].mxu0
          %v1123 = vadd.f32 %v955, %v1122
          %v1124 = vpop.f32.mrb[0].mxu0
          %1125 = vmatprep.mubr.bf16.mxu0 0
          %1126 = vmatmul.mubr.bf16.gmra.mrb[0].mxu0 %v697
          %v1127 = vpop.f32.mrb[0].mxu0
          %v1128 = vadd.f32 %v955, %v1127
          %v1129 = vpop.f32.mrb[0].mxu0
          %v1130 = vpop.f32.mrb[0].mxu0
          %v1131 = vadd.f32 %v955, %v1130
          %v1132 = vpop.f32.mrb[0].mxu0
          %1133 = vmatprep.mubr.bf16.mxu0 0
          %1134 = vmatmul.mubr.bf16.gmra.mrb[0].mxu0 %v698
          %v1135 = vpop.f32.mrb[0].mxu0
          %v1136 = vadd.f32 %v955, %v1135
          %v1137 = vpop.f32.mrb[0].mxu0
          %v1138 = vpop.f32.mrb[0].mxu0
          %v1139 = vadd.f32 %v955, %v1138
          %v1140 = vpop.f32.mrb[0].mxu0
          %1141 = vmatprep.mubr.bf16.mxu0 0
          %1142 = vmatmul.mubr.bf16.gmra.mrb[0].mxu0 %v699
          %v1143 = vpop.f32.mrb[0].mxu0
          %v1144 = vadd.f32 %v955, %v1143
          %v1145 = vpop.f32.mrb[0].mxu0
          %v1146 = vpop.f32.mrb[0].mxu0
          %v1147 = vadd.f32 %v955, %v1146
          %v1148 = vpop.f32.mrb[0].mxu0
          %1149 = vmatprep.mubr.bf16.mxu0 0
          %1150 = vmatmul.mubr.bf16.gmra.mrb[0].mxu0 %v700
          %v1151 = vpop.f32.mrb[0].mxu0
          %v1152 = vadd.f32 %v955, %v1151
          %v1153 = vpop.f32.mrb[0].mxu0
          %v1154 = vpop.f32.mrb[0].mxu0
          %v1155 = vadd.f32 %v955, %v1154
          %v1156 = vpop.f32.mrb[0].mxu0
          %1157 = vmatprep.mubr.bf16.mxu0 0
          %1158 = vmatmul.mubr.bf16.gmra.mrb[0].mxu0 %v701
          %v1159 = vpop.f32.mrb[0].mxu0
          %v1160 = vadd.f32 %v955, %v1159
          %v1161 = vpop.f32.mrb[0].mxu0
          %v1162 = vpop.f32.mrb[0].mxu0
          %v1163 = vadd.f32 %v955, %v1162
          %v1164 = vpop.f32.mrb[0].mxu0
          %1165 = vdwg.mxu0
          %v1166 = vpack.c.bf16 %v811, %v808
          %v1167 = vpack.c.bf16 %v819, %v816
          %v1168 = vpack.c.bf16 %v827, %v824
          %v1169 = vpack.c.bf16 %v835, %v832
          %v1170 = vpack.c.bf16 %v843, %v840
          %v1171 = vpack.c.bf16 %v851, %v848
          %v1172 = vpack.c.bf16 %v859, %v856
          %v1173 = vpack.c.bf16 %v867, %v864
          %v1174 = vpack.c.bf16 %v875, %v872
          %v1175 = vpack.c.bf16 %v883, %v880
          %v1176 = vpack.c.bf16 %v891, %v888
          %v1177 = vpack.c.bf16 %v899, %v896
          %v1178 = vpack.c.bf16 %v907, %v904
          %v1179 = vpack.c.bf16 %v915, %v912
          %v1180 = vpack.c.bf16 %v923, %v920
          %v1181 = vpack.c.bf16 %v931, %v928
          %1182 = vst [vmem:[#allocation2] sm:$0xff] %v1166
          %1183 = vst [vmem:[#allocation2 + $0x8] sm:$0xff] %v1167
          %1184 = vst [vmem:[#allocation2 + $0x10] sm:$0xff] %v1168
          %1185 = vst [vmem:[#allocation2 + $0x18] sm:$0xff] %v1169
          %1186 = vst [vmem:[#allocation2 + $0x20] sm:$0xff] %v1170
          %1187 = vst [vmem:[#allocation2 + $0x28] sm:$0xff] %v1171
          %1188 = vst [vmem:[#allocation2 + $0x30] sm:$0xff] %v1172
          %1189 = vst [vmem:[#allocation2 + $0x38] sm:$0xff] %v1173
          %1190 = vst [vmem:[#allocation2 + $0x40] sm:$0xff] %v1174
          %1191 = vst [vmem:[#allocation2 + $0x48] sm:$0xff] %v1175
          %1192 = vst [vmem:[#allocation2 + $0x50] sm:$0xff] %v1176
          %1193 = vst [vmem:[#allocation2 + $0x58] sm:$0xff] %v1177
          %1194 = vst [vmem:[#allocation2 + $0x60] sm:$0xff] %v1178
          %1195 = vst [vmem:[#allocation2 + $0x68] sm:$0xff] %v1179
          %1196 = vst [vmem:[#allocation2 + $0x70] sm:$0xff] %v1180
          %1197 = vst [vmem:[#allocation2 + $0x78] sm:$0xff] %v1181
          %v1198 = vpack.c.bf16 %v1043, %v1040
          %v1199 = vpack.c.bf16 %v1051, %v1048
          %v1200 = vpack.c.bf16 %v1059, %v1056
          %v1201 = vpack.c.bf16 %v1067, %v1064
          %v1202 = vpack.c.bf16 %v1075, %v1072
          %v1203 = vpack.c.bf16 %v1083, %v1080
          %v1204 = vpack.c.bf16 %v1091, %v1088
          %v1205 = vpack.c.bf16 %v1099, %v1096
          %v1206 = vpack.c.bf16 %v1107, %v1104
          %v1207 = vpack.c.bf16 %v1115, %v1112
          %v1208 = vpack.c.bf16 %v1123, %v1120
          %v1209 = vpack.c.bf16 %v1131, %v1128
          %v1210 = vpack.c.bf16 %v1139, %v1136
          %v1211 = vpack.c.bf16 %v1147, %v1144
          %v1212 = vpack.c.bf16 %v1155, %v1152
          %v1213 = vpack.c.bf16 %v1163, %v1160
          %1214 = vst [vmem:[#allocation3] sm:$0xff] %v1198
          %1215 = vst [vmem:[#allocation3 + $0x8] sm:$0xff] %v1199
          %1216 = vst [vmem:[#allocation3 + $0x10] sm:$0xff] %v1200
          %1217 = vst [vmem:[#allocation3 + $0x18] sm:$0xff] %v1201
          %1218 = vst [vmem:[#allocation3 + $0x20] sm:$0xff] %v1202
          %1219 = vst [vmem:[#allocation3 + $0x28] sm:$0xff] %v1203
          %1220 = vst [vmem:[#allocation3 + $0x30] sm:$0xff] %v1204
          %1221 = vst [vmem:[#allocation3 + $0x38] sm:$0xff] %v1205
          %1222 = vst [vmem:[#allocation3 + $0x40] sm:$0xff] %v1206
          %1223 = vst [vmem:[#allocation3 + $0x48] sm:$0xff] %v1207
          %1224 = vst [vmem:[#allocation3 + $0x50] sm:$0xff] %v1208
          %1225 = vst [vmem:[#allocation3 + $0x58] sm:$0xff] %v1209
          %1226 = vst [vmem:[#allocation3 + $0x60] sm:$0xff] %v1210
          %1227 = vst [vmem:[#allocation3 + $0x68] sm:$0xff] %v1211
          %1228 = vst [vmem:[#allocation3 + $0x70] sm:$0xff] %v1212
          %1229 = vst [vmem:[#allocation3 + $0x78] sm:$0xff] %v1213
        $region96: #{tpu_custom_call.1} parent=63 // pred_fallthru
          _
        %v1230 = vld [vmem:[%s508] sm:$0xff]
        %v1231 = vld [vmem:[%s508 + $0x8] sm:$0xff]
        %v1232 = vld [vmem:[%s508 + $0x10] sm:$0xff]
        %v1233 = vld [vmem:[%s508 + $0x18] sm:$0xff]
        %v1234 = vld [vmem:[%s508 + $0x20] sm:$0xff]
        %v1235 = vld [vmem:[%s508 + $0x28] sm:$0xff]
        %v1236 = vld [vmem:[%s508 + $0x30] sm:$0xff]
        %v1237 = vld [vmem:[%s508 + $0x38] sm:$0xff]
        %v1238 = vld [vmem:[%s508 + $0x40] sm:$0xff]
        %v1239 = vld [vmem:[%s508 + $0x48] sm:$0xff]
        %v1240 = vld [vmem:[%s508 + $0x50] sm:$0xff]
        %v1241 = vld [vmem:[%s508 + $0x58] sm:$0xff]
        %v1242 = vld [vmem:[%s508 + $0x60] sm:$0xff]
        %v1243 = vld [vmem:[%s508 + $0x68] sm:$0xff]
        %v1244 = vld [vmem:[%s508 + $0x70] sm:$0xff]
        %v1245 = vld [vmem:[%s508 + $0x78] sm:$0xff]
        %v1246 = vpack.c.bf16 %v1231, %v1230
        %v1247 = vpack.c.bf16 %v1233, %v1232
        %v1248 = vpack.c.bf16 %v1235, %v1234
        %v1249 = vpack.c.bf16 %v1237, %v1236
        %v1250 = vpack.c.bf16 %v1239, %v1238
        %v1251 = vpack.c.bf16 %v1241, %v1240
        %v1252 = vpack.c.bf16 %v1243, %v1242
        %v1253 = vpack.c.bf16 %v1245, %v1244
        %v1254 = vld [vmem:[#allocation11] sm:$0xf]
        %v1255 = vld [vmem:[#allocation11 + $0x4] sm:$0xf]
        %v1256 = vld [vmem:[#allocation11 + $0x8] sm:$0xf]
        %v1257 = vld [vmem:[#allocation11 + $0xc] sm:$0xf]
        %v1258 = vld [vmem:[#allocation11 + $0x10] sm:$0xf]
        %v1259 = vld [vmem:[#allocation11 + $0x14] sm:$0xf]
        %v1260 = vld [vmem:[#allocation11 + $0x18] sm:$0xf]
        %v1261 = vld [vmem:[#allocation11 + $0x1c] sm:$0xf]
        %v1262 = vld [vmem:[#allocation11 + $0x20] sm:$0xf]
        %v1263 = vld [vmem:[#allocation11 + $0x24] sm:$0xf]
        %v1264 = vld [vmem:[#allocation11 + $0x28] sm:$0xf]
        %v1265 = vld [vmem:[#allocation11 + $0x2c] sm:$0xf]
        %v1266 = vld [vmem:[#allocation11 + $0x30] sm:$0xf]
        %v1267 = vld [vmem:[#allocation11 + $0x34] sm:$0xf]
        %v1268 = vld [vmem:[#allocation11 + $0x38] sm:$0xf]
        %v1269 = vld [vmem:[#allocation11 + $0x3c] sm:$0xf]
        %v1270 = vld [vmem:[%s4] sm:$0x1]
        %v1272 = vlaneseq
        %v1273 = vshrl.u32 %v1272, 7
        %v1274 = vsub.s32 0, %v1273
        %v1275 = vrot.slane %v1270, %v1274
        %v1293 = vunpack.c.l.b16 %v1254
        %v1294 = vunpack.c.l.b16 %v1255
        %v1295 = vunpack.c.l.b16 %v1256
        %v1296 = vunpack.c.l.b16 %v1257
        %v1297 = vunpack.c.l.b16 %v1258
        %v1298 = vunpack.c.l.b16 %v1259
        %v1299 = vunpack.c.l.b16 %v1260
        %v1300 = vunpack.c.l.b16 %v1261
        %v1301 = vunpack.c.l.b16 %v1262
        %v1302 = vunpack.c.l.b16 %v1263
        %v1303 = vunpack.c.l.b16 %v1264
        %v1304 = vunpack.c.l.b16 %v1265
        %v1305 = vunpack.c.l.b16 %v1266
        %v1306 = vunpack.c.l.b16 %v1267
        %v1307 = vunpack.c.l.b16 %v1268
        %v1308 = vunpack.c.l.b16 %v1269
        %v1309 = vpack.c.b16 %v1294, %v1293
        %v1310 = vpack.c.b16 %v1296, %v1295
        %v1311 = vpack.c.b16 %v1298, %v1297
        %v1312 = vpack.c.b16 %v1300, %v1299
        %v1313 = vpack.c.b16 %v1302, %v1301
        %v1314 = vpack.c.b16 %v1304, %v1303
        %v1315 = vpack.c.b16 %v1306, %v1305
        %v1316 = vpack.c.b16 %v1308, %v1307
        %1325 = vmatprep.subr.bf16.mxu0 0
        %1326 = vmatpush1.bf16.msra.mxu0 %v1309
        %1327 = vmatprep.subr.bf16.mxu0 0
        %1328 = vmatpush1.bf16.msra.mxu0 %v1310
        %1329 = vmatprep.subr.bf16.mxu0 0
        %1330 = vmatpush1.bf16.msra.mxu0 %v1311
        %1331 = vmatprep.subr.bf16.mxu0 0
        %1332 = vmatpush1.bf16.msra.mxu0 %v1312
        %1333 = vmatprep.subr.bf16.mxu0 0
        %1334 = vmatpush1.bf16.msra.mxu0 %v1313
        %1335 = vmatprep.subr.bf16.mxu0 0
        %1336 = vmatpush1.bf16.msra.mxu0 %v1314
        %1337 = vmatprep.subr.bf16.mxu0 0
        %1338 = vmatpush1.bf16.msra.mxu0 %v1315
        %1339 = vmatprep.subr.bf16.mxu0 0
        %1340 = vmatpush1.bf16.msra.mxu0 %v1316
        %1341 = vmatprep.subr.bf16.mxu0 0
        %1342 = vmatpush1.bf16.msra.mxu0 0
        %1343 = vmatprep.subr.bf16.mxu0 0
        %1344 = vmatpush1.bf16.msra.mxu0 0
        %1345 = vmatprep.subr.bf16.mxu0 0
        %1346 = vmatpush1.bf16.msra.mxu0 0
        %1347 = vmatprep.subr.bf16.mxu0 0
        %1348 = vmatpush1.bf16.msra.mxu0 0
        %1349 = vmatprep.subr.bf16.mxu0 0
        %1350 = vmatpush1.bf16.msra.mxu0 0
        %1351 = vmatprep.subr.bf16.mxu0 0
        %1352 = vmatpush1.bf16.msra.mxu0 0
        %1353 = vmatprep.subr.bf16.mxu0 0
        %1354 = vmatpush1.bf16.msra.mxu0 0
        %1355 = vmatprep.subr.bf16.mxu0 0
        %1356 = vmatpush1.bf16.msra.mxu0 0
        %1357 = vmatprep.mubr.bf16.mxu0 0
        %1358 = vmatmul.mubr.bf16.gmra.mrb[0].mxu0 %v1246
        %v1359 = vpop.f32.mrb[0].mxu0
        %v1360 = vadd.f32 %v1275, %v1359
        %v1361 = vpop.f32.mrb[0].mxu0
        %v1362 = vpop.f32.mrb[0].mxu0
        %v1363 = vadd.f32 %v1275, %v1362
        %v1364 = vpop.f32.mrb[0].mxu0
        %1365 = vmatprep.mubr.bf16.mxu0 0
        %1366 = vmatmul.mubr.bf16.gmra.mrb[0].mxu0 %v1247
        %v1367 = vpop.f32.mrb[0].mxu0
        %v1368 = vadd.f32 %v1275, %v1367
        %v1369 = vpop.f32.mrb[0].mxu0
        %v1370 = vpop.f32.mrb[0].mxu0
        %v1371 = vadd.f32 %v1275, %v1370
        %v1372 = vpop.f32.mrb[0].mxu0
        %1373 = vmatprep.mubr.bf16.mxu0 0
        %1374 = vmatmul.mubr.bf16.gmra.mrb[0].mxu0 %v1248
        %v1375 = vpop.f32.mrb[0].mxu0
        %v1376 = vadd.f32 %v1275, %v1375
        %v1377 = vpop.f32.mrb[0].mxu0
        %v1378 = vpop.f32.mrb[0].mxu0
        %v1379 = vadd.f32 %v1275, %v1378
        %v1380 = vpop.f32.mrb[0].mxu0
        %1381 = vmatprep.mubr.bf16.mxu0 0
        %1382 = vmatmul.mubr.bf16.gmra.mrb[0].mxu0 %v1249
        %v1383 = vpop.f32.mrb[0].mxu0
        %v1384 = vadd.f32 %v1275, %v1383
        %v1385 = vpop.f32.mrb[0].mxu0
        %v1386 = vpop.f32.mrb[0].mxu0
        %v1387 = vadd.f32 %v1275, %v1386
        %v1388 = vpop.f32.mrb[0].mxu0
        %1389 = vmatprep.mubr.bf16.mxu0 0
        %1390 = vmatmul.mubr.bf16.gmra.mrb[0].mxu0 %v1250
        %v1391 = vpop.f32.mrb[0].mxu0
        %v1392 = vadd.f32 %v1275, %v1391
        %v1393 = vpop.f32.mrb[0].mxu0
        %v1394 = vpop.f32.mrb[0].mxu0
        %v1395 = vadd.f32 %v1275, %v1394
        %v1396 = vpop.f32.mrb[0].mxu0
        %1397 = vmatprep.mubr.bf16.mxu0 0
        %1398 = vmatmul.mubr.bf16.gmra.mrb[0].mxu0 %v1251
        %v1399 = vpop.f32.mrb[0].mxu0
        %v1400 = vadd.f32 %v1275, %v1399
        %v1401 = vpop.f32.mrb[0].mxu0
        %v1402 = vpop.f32.mrb[0].mxu0
        %v1403 = vadd.f32 %v1275, %v1402
        %v1404 = vpop.f32.mrb[0].mxu0
        %1405 = vmatprep.mubr.bf16.mxu0 0
        %1406 = vmatmul.mubr.bf16.gmra.mrb[0].mxu0 %v1252
        %v1407 = vpop.f32.mrb[0].mxu0
        %v1408 = vadd.f32 %v1275, %v1407
        %v1409 = vpop.f32.mrb[0].mxu0
        %v1410 = vpop.f32.mrb[0].mxu0
        %v1411 = vadd.f32 %v1275, %v1410
        %v1412 = vpop.f32.mrb[0].mxu0
        %1413 = vmatprep.mubr.bf16.mxu0 0
        %1414 = vmatmul.mubr.bf16.gmra.mrb[0].mxu0 %v1253
        %v1415 = vpop.f32.mrb[0].mxu0
        %v1416 = vadd.f32 %v1275, %v1415
        %v1417 = vpop.f32.mrb[0].mxu0
        %v1418 = vpop.f32.mrb[0].mxu0
        %v1419 = vadd.f32 %v1275, %v1418
        %v1420 = vpop.f32.mrb[0].mxu0
        %1421 = vdwg.mxu0
        %v1422 = vmul.f32 %v1360, 0.088388346
        %v1423 = vmul.f32 %v1363, 0.088388346
        %v1424 = vmul.f32 %v1368, 0.088388346
        %v1425 = vmul.f32 %v1371, 0.088388346
        %v1426 = vmul.f32 %v1376, 0.088388346
        %v1427 = vmul.f32 %v1379, 0.088388346
        %v1428 = vmul.f32 %v1384, 0.088388346
        %v1429 = vmul.f32 %v1387, 0.088388346
        %v1430 = vmul.f32 %v1392, 0.088388346
        %v1431 = vmul.f32 %v1395, 0.088388346
        %v1432 = vmul.f32 %v1400, 0.088388346
        %v1433 = vmul.f32 %v1403, 0.088388346
        %v1434 = vmul.f32 %v1408, 0.088388346
        %v1435 = vmul.f32 %v1411, 0.088388346
        %v1436 = vmul.f32 %v1416, 0.088388346
        %v1437 = vmul.f32 %v1419, 0.088388346
        %v1438 = vpack.c.bf16 %v1423, %v1422
        %v1439 = vpack.c.bf16 %v1425, %v1424
        %v1440 = vpack.c.bf16 %v1427, %v1426
        %v1441 = vpack.c.bf16 %v1429, %v1428
        %v1442 = vpack.c.bf16 %v1431, %v1430
        %v1443 = vpack.c.bf16 %v1433, %v1432
        %v1444 = vpack.c.bf16 %v1435, %v1434
        %v1445 = vpack.c.bf16 %v1437, %v1436
        %v1446 = vld [vmem:[#allocation2] sm:$0xff]
        %v1447 = vld [vmem:[#allocation2 + $0x8] sm:$0xff]
        %v1448 = vld [vmem:[#allocation2 + $0x10] sm:$0xff]
        %v1449 = vld [vmem:[#allocation2 + $0x18] sm:$0xff]
        %v1450 = vld [vmem:[#allocation2 + $0x20] sm:$0xff]
        %v1451 = vld [vmem:[#allocation2 + $0x28] sm:$0xff]
        %v1452 = vld [vmem:[#allocation2 + $0x30] sm:$0xff]
        %v1453 = vld [vmem:[#allocation2 + $0x38] sm:$0xff]
        %v1454 = vld [vmem:[#allocation2 + $0x40] sm:$0xff]
        %v1455 = vld [vmem:[#allocation2 + $0x48] sm:$0xff]
        %v1456 = vld [vmem:[#allocation2 + $0x50] sm:$0xff]
        %v1457 = vld [vmem:[#allocation2 + $0x58] sm:$0xff]
        %v1458 = vld [vmem:[#allocation2 + $0x60] sm:$0xff]
        %v1459 = vld [vmem:[#allocation2 + $0x68] sm:$0xff]
        %v1460 = vld [vmem:[#allocation2 + $0x70] sm:$0xff]
        %v1461 = vld [vmem:[#allocation2 + $0x78] sm:$0xff]
        %v1462 = vld [vmem:[#allocation3] sm:$0xff]
        %v1463 = vld [vmem:[#allocation3 + $0x8] sm:$0xff]
        %v1464 = vld [vmem:[#allocation3 + $0x10] sm:$0xff]
        %v1465 = vld [vmem:[#allocation3 + $0x18] sm:$0xff]
        %v1466 = vld [vmem:[#allocation3 + $0x20] sm:$0xff]
        %v1467 = vld [vmem:[#allocation3 + $0x28] sm:$0xff]
        %v1468 = vld [vmem:[#allocation3 + $0x30] sm:$0xff]
        %v1469 = vld [vmem:[#allocation3 + $0x38] sm:$0xff]
        %v1470 = vld [vmem:[#allocation3 + $0x40] sm:$0xff]
        %v1471 = vld [vmem:[#allocation3 + $0x48] sm:$0xff]
        %v1472 = vld [vmem:[#allocation3 + $0x50] sm:$0xff]
        %v1473 = vld [vmem:[#allocation3 + $0x58] sm:$0xff]
        %v1474 = vld [vmem:[#allocation3 + $0x60] sm:$0xff]
        %v1475 = vld [vmem:[#allocation3 + $0x68] sm:$0xff]
        %v1476 = vld [vmem:[#allocation3 + $0x70] sm:$0xff]
        %v1477 = vld [vmem:[#allocation3 + $0x78] sm:$0xff]
        %1478 = vmatprep.subr.bf16.mxu0 0
        %1479 = vmatpush1.bf16.xpose.msra.mxu0 %v1446
        %1480 = vmatprep.subr.bf16.mxu0 0
        %1481 = vmatpush1.bf16.xpose.msra.mxu0 %v1447
        %1482 = vmatprep.subr.bf16.mxu0 0
        %1483 = vmatpush1.bf16.xpose.msra.mxu0 %v1448
        %1484 = vmatprep.subr.bf16.mxu0 0
        %1485 = vmatpush1.bf16.xpose.msra.mxu0 %v1449
        %1486 = vmatprep.subr.bf16.mxu0 0
        %1487 = vmatpush1.bf16.xpose.msra.mxu0 %v1450
        %1488 = vmatprep.subr.bf16.mxu0 0
        %1489 = vmatpush1.bf16.xpose.msra.mxu0 %v1451
        %1490 = vmatprep.subr.bf16.mxu0 0
        %1491 = vmatpush1.bf16.xpose.msra.mxu0 %v1452
        %1492 = vmatprep.subr.bf16.mxu0 0
        %1493 = vmatpush1.bf16.xpose.msra.mxu0 %v1453
        %1494 = vmatprep.subr.bf16.mxu0 0
        %1495 = vmatpush1.bf16.xpose.msra.mxu0 %v1454
        %1496 = vmatprep.subr.bf16.mxu0 0
        %1497 = vmatpush1.bf16.xpose.msra.mxu0 %v1455
        %1498 = vmatprep.subr.bf16.mxu0 0
        %1499 = vmatpush1.bf16.xpose.msra.mxu0 %v1456
        %1500 = vmatprep.subr.bf16.mxu0 0
        %1501 = vmatpush1.bf16.xpose.msra.mxu0 %v1457
        %1502 = vmatprep.subr.bf16.mxu0 0
        %1503 = vmatpush1.bf16.xpose.msra.mxu0 %v1458
        %1504 = vmatprep.subr.bf16.mxu0 0
        %1505 = vmatpush1.bf16.xpose.msra.mxu0 %v1459
        %1506 = vmatprep.subr.bf16.mxu0 0
        %1507 = vmatpush1.bf16.xpose.msra.mxu0 %v1460
        %1508 = vmatprep.subr.bf16.mxu0 0
        %1509 = vmatpush1.bf16.xpose.msra.mxu0 %v1461
        %1510 = vmatprep.mubr.bf16.mxu0 0
        %1511 = vmatmul.mubr.bf16.gmra.mrb[0].mxu0 %v1438
        %v1512 = vpop.f32.mrb[0].mxu0
        %v1513 = vadd.f32 0.0, %v1512
        %v1514 = vpop.f32.mrb[0].mxu0
        %v1515 = vadd.f32 0.0, %v1514
        %v1516 = vpop.f32.mrb[0].mxu0
        %v1517 = vadd.f32 0.0, %v1516
        %v1518 = vpop.f32.mrb[0].mxu0
        %v1519 = vadd.f32 0.0, %v1518
        %1520 = vmatprep.mubr.bf16.mxu0 0
        %1521 = vmatmul.mubr.bf16.gmra.mrb[0].mxu0 %v1439
        %v1522 = vpop.f32.mrb[0].mxu0
        %v1523 = vadd.f32 0.0, %v1522
        %v1524 = vpop.f32.mrb[0].mxu0
        %v1525 = vadd.f32 0.0, %v1524
        %v1526 = vpop.f32.mrb[0].mxu0
        %v1527 = vadd.f32 0.0, %v1526
        %v1528 = vpop.f32.mrb[0].mxu0
        %v1529 = vadd.f32 0.0, %v1528
        %1530 = vmatprep.mubr.bf16.mxu0 0
        %1531 = vmatmul.mubr.bf16.gmra.mrb[0].mxu0 %v1440
        %v1532 = vpop.f32.mrb[0].mxu0
        %v1533 = vadd.f32 0.0, %v1532
        %v1534 = vpop.f32.mrb[0].mxu0
        %v1535 = vadd.f32 0.0, %v1534
        %v1536 = vpop.f32.mrb[0].mxu0
        %v1537 = vadd.f32 0.0, %v1536
        %v1538 = vpop.f32.mrb[0].mxu0
        %v1539 = vadd.f32 0.0, %v1538
        %1540 = vmatprep.mubr.bf16.mxu0 0
        %1541 = vmatmul.mubr.bf16.gmra.mrb[0].mxu0 %v1441
        %v1542 = vpop.f32.mrb[0].mxu0
        %v1543 = vadd.f32 0.0, %v1542
        %v1544 = vpop.f32.mrb[0].mxu0
        %v1545 = vadd.f32 0.0, %v1544
        %v1546 = vpop.f32.mrb[0].mxu0
        %v1547 = vadd.f32 0.0, %v1546
        %v1548 = vpop.f32.mrb[0].mxu0
        %v1549 = vadd.f32 0.0, %v1548
        %1550 = vmatprep.mubr.bf16.mxu0 0
        %1551 = vmatmul.mubr.bf16.gmra.mrb[0].mxu0 %v1442
        %v1552 = vpop.f32.mrb[0].mxu0
        %v1553 = vadd.f32 0.0, %v1552
        %v1554 = vpop.f32.mrb[0].mxu0
        %v1555 = vadd.f32 0.0, %v1554
        %v1556 = vpop.f32.mrb[0].mxu0
        %v1557 = vadd.f32 0.0, %v1556
        %v1558 = vpop.f32.mrb[0].mxu0
        %v1559 = vadd.f32 0.0, %v1558
        %1560 = vmatprep.mubr.bf16.mxu0 0
        %1561 = vmatmul.mubr.bf16.gmra.mrb[0].mxu0 %v1443
        %v1562 = vpop.f32.mrb[0].mxu0
        %v1563 = vadd.f32 0.0, %v1562
        %v1564 = vpop.f32.mrb[0].mxu0
        %v1565 = vadd.f32 0.0, %v1564
        %v1566 = vpop.f32.mrb[0].mxu0
        %v1567 = vadd.f32 0.0, %v1566
        %v1568 = vpop.f32.mrb[0].mxu0
        %v1569 = vadd.f32 0.0, %v1568
        %1570 = vmatprep.mubr.bf16.mxu0 0
        %1571 = vmatmul.mubr.bf16.gmra.mrb[0].mxu0 %v1444
        %v1572 = vpop.f32.mrb[0].mxu0
        %v1573 = vadd.f32 0.0, %v1572
        %v1574 = vpop.f32.mrb[0].mxu0
        %v1575 = vadd.f32 0.0, %v1574
        %v1576 = vpop.f32.mrb[0].mxu0
        %v1577 = vadd.f32 0.0, %v1576
        %v1578 = vpop.f32.mrb[0].mxu0
        %v1579 = vadd.f32 0.0, %v1578
        %1580 = vmatprep.mubr.bf16.mxu0 0
        %1581 = vmatmul.mubr.bf16.gmra.mrb[0].mxu0 %v1445
        %v1582 = vpop.f32.mrb[0].mxu0
        %v1583 = vadd.f32 0.0, %v1582
        %v1584 = vpop.f32.mrb[0].mxu0
        %v1585 = vadd.f32 0.0, %v1584
        %v1586 = vpop.f32.mrb[0].mxu0
        %v1587 = vadd.f32 0.0, %v1586
        %v1588 = vpop.f32.mrb[0].mxu0
        %v1589 = vadd.f32 0.0, %v1588
        %1590 = vdwg.mxu0
        %v1591 = vmax.f32 %v1513, %v1515
        %1592 = vmax.xlane.f32.xlu0 %v1591
        %v1593 = vpop.xlane.xlu0 %1592
        %v1594 = vmax.f32 %v1517, %v1519
        %1595 = vmax.xlane.f32.xlu0 %v1594
        %v1596 = vpop.xlane.xlu0 %1595
        %v1597 = vmax.f32 %v1523, %v1525
        %1598 = vmax.xlane.f32.xlu0 %v1597
        %v1599 = vpop.xlane.xlu0 %1598
        %v1600 = vmax.f32 %v1527, %v1529
        %1601 = vmax.xlane.f32.xlu0 %v1600
        %v1602 = vpop.xlane.xlu0 %1601
        %v1603 = vmax.f32 %v1533, %v1535
        %1604 = vmax.xlane.f32.xlu0 %v1603
        %v1605 = vpop.xlane.xlu0 %1604
        %v1606 = vmax.f32 %v1537, %v1539
        %1607 = vmax.xlane.f32.xlu0 %v1606
        %v1608 = vpop.xlane.xlu0 %1607
        %v1609 = vmax.f32 %v1543, %v1545
        %1610 = vmax.xlane.f32.xlu0 %v1609
        %v1611 = vpop.xlane.xlu0 %1610
        %v1612 = vmax.f32 %v1547, %v1549
        %1613 = vmax.xlane.f32.xlu0 %v1612
        %v1614 = vpop.xlane.xlu0 %1613
        %v1615 = vmax.f32 %v1553, %v1555
        %1616 = vmax.xlane.f32.xlu0 %v1615
        %v1617 = vpop.xlane.xlu0 %1616
        %v1618 = vmax.f32 %v1557, %v1559
        %1619 = vmax.xlane.f32.xlu0 %v1618
        %v1620 = vpop.xlane.xlu0 %1619
        %v1621 = vmax.f32 %v1563, %v1565
        %1622 = vmax.xlane.f32.xlu0 %v1621
        %v1623 = vpop.xlane.xlu0 %1622
        %v1624 = vmax.f32 %v1567, %v1569
        %1625 = vmax.xlane.f32.xlu0 %v1624
        %v1626 = vpop.xlane.xlu0 %1625
        %v1627 = vmax.f32 %v1573, %v1575
        %1628 = vmax.xlane.f32.xlu0 %v1627
        %v1629 = vpop.xlane.xlu0 %1628
        %v1630 = vmax.f32 %v1577, %v1579
        %1631 = vmax.xlane.f32.xlu0 %v1630
        %v1632 = vpop.xlane.xlu0 %1631
        %v1633 = vmax.f32 %v1583, %v1585
        %1634 = vmax.xlane.f32.xlu0 %v1633
        %v1635 = vpop.xlane.xlu0 %1634
        %v1636 = vmax.f32 %v1587, %v1589
        %1637 = vmax.xlane.f32.xlu0 %v1636
        %v1638 = vpop.xlane.xlu0 %1637
        %v1639 = vsub.f32 %v1513, %v1593
        %v1640 = vsub.f32 %v1515, %v1593
        %v1641 = vsub.f32 %v1517, %v1596
        %v1642 = vsub.f32 %v1519, %v1596
        %v1643 = vsub.f32 %v1523, %v1599
        %v1644 = vsub.f32 %v1525, %v1599
        %v1645 = vsub.f32 %v1527, %v1602
        %v1646 = vsub.f32 %v1529, %v1602
        %v1647 = vsub.f32 %v1533, %v1605
        %v1648 = vsub.f32 %v1535, %v1605
        %v1649 = vsub.f32 %v1537, %v1608
        %v1650 = vsub.f32 %v1539, %v1608
        %v1651 = vsub.f32 %v1543, %v1611
        %v1652 = vsub.f32 %v1545, %v1611
        %v1653 = vsub.f32 %v1547, %v1614
        %v1654 = vsub.f32 %v1549, %v1614
        %v1655 = vsub.f32 %v1553, %v1617
        %v1656 = vsub.f32 %v1555, %v1617
        %v1657 = vsub.f32 %v1557, %v1620
        %v1658 = vsub.f32 %v1559, %v1620
        %v1659 = vsub.f32 %v1563, %v1623
        %v1660 = vsub.f32 %v1565, %v1623
        %v1661 = vsub.f32 %v1567, %v1626
        %v1662 = vsub.f32 %v1569, %v1626
        %v1663 = vsub.f32 %v1573, %v1629
        %v1664 = vsub.f32 %v1575, %v1629
        %v1665 = vsub.f32 %v1577, %v1632
        %v1666 = vsub.f32 %v1579, %v1632
        %v1667 = vsub.f32 %v1583, %v1635
        %v1668 = vsub.f32 %v1585, %v1635
        %v1669 = vsub.f32 %v1587, %v1638
        %v1670 = vsub.f32 %v1589, %v1638
        %v1671 = vmul.f32 %v1639, 1.442695
        %v1672 = vpow.pop %v1671
        %v1673 = vmul.f32 %v1640, 1.442695
        %v1674 = vpow.pop %v1673
        %v1675 = vmul.f32 %v1641, 1.442695
        %v1676 = vpow.pop %v1675
        %v1677 = vmul.f32 %v1642, 1.442695
        %v1678 = vpow.pop %v1677
        %v1679 = vmul.f32 %v1643, 1.442695
        %v1680 = vpow.pop %v1679
        %v1681 = vmul.f32 %v1644, 1.442695
        %v1682 = vpow.pop %v1681
        %v1683 = vmul.f32 %v1645, 1.442695
        %v1684 = vpow.pop %v1683
        %v1685 = vmul.f32 %v1646, 1.442695
        %v1686 = vpow.pop %v1685
        %v1687 = vmul.f32 %v1647, 1.442695
        %v1688 = vpow.pop %v1687
        %v1689 = vmul.f32 %v1648, 1.442695
        %v1690 = vpow.pop %v1689
        %v1691 = vmul.f32 %v1649, 1.442695
        %v1692 = vpow.pop %v1691
        %v1693 = vmul.f32 %v1650, 1.442695
        %v1694 = vpow.pop %v1693
        %v1695 = vmul.f32 %v1651, 1.442695
        %v1696 = vpow.pop %v1695
        %v1697 = vmul.f32 %v1652, 1.442695
        %v1698 = vpow.pop %v1697
        %v1699 = vmul.f32 %v1653, 1.442695
        %v1700 = vpow.pop %v1699
        %v1701 = vmul.f32 %v1654, 1.442695
        %v1702 = vpow.pop %v1701
        %v1703 = vmul.f32 %v1655, 1.442695
        %v1704 = vpow.pop %v1703
        %v1705 = vmul.f32 %v1656, 1.442695
        %v1706 = vpow.pop %v1705
        %v1707 = vmul.f32 %v1657, 1.442695
        %v1708 = vpow.pop %v1707
        %v1709 = vmul.f32 %v1658, 1.442695
        %v1710 = vpow.pop %v1709
        %v1711 = vmul.f32 %v1659, 1.442695
        %v1712 = vpow.pop %v1711
        %v1713 = vmul.f32 %v1660, 1.442695
        %v1714 = vpow.pop %v1713
        %v1715 = vmul.f32 %v1661, 1.442695
        %v1716 = vpow.pop %v1715
        %v1717 = vmul.f32 %v1662, 1.442695
        %v1718 = vpow.pop %v1717
        %v1719 = vmul.f32 %v1663, 1.442695
        %v1720 = vpow.pop %v1719
        %v1721 = vmul.f32 %v1664, 1.442695
        %v1722 = vpow.pop %v1721
        %v1723 = vmul.f32 %v1665, 1.442695
        %v1724 = vpow.pop %v1723
        %v1725 = vmul.f32 %v1666, 1.442695
        %v1726 = vpow.pop %v1725
        %v1727 = vmul.f32 %v1667, 1.442695
        %v1728 = vpow.pop %v1727
        %v1729 = vmul.f32 %v1668, 1.442695
        %v1730 = vpow.pop %v1729
        %v1731 = vmul.f32 %v1669, 1.442695
        %v1732 = vpow.pop %v1731
        %v1733 = vmul.f32 %v1670, 1.442695
        %v1734 = vpow.pop %v1733
        %v1735 = vadd.f32 %v1672, %v1674
        %1736 = vadd.xlane.f32.xlu0 %v1735
        %v1737 = vpop.xlane.xlu0 %1736
        %v1738 = vadd.f32 %v1676, %v1678
        %1739 = vadd.xlane.f32.xlu0 %v1738
        %v1740 = vpop.xlane.xlu0 %1739
        %v1741 = vadd.f32 %v1680, %v1682
        %1742 = vadd.xlane.f32.xlu0 %v1741
        %v1743 = vpop.xlane.xlu0 %1742
        %v1744 = vadd.f32 %v1684, %v1686
        %1745 = vadd.xlane.f32.xlu0 %v1744
        %v1746 = vpop.xlane.xlu0 %1745
        %v1747 = vadd.f32 %v1688, %v1690
        %1748 = vadd.xlane.f32.xlu0 %v1747
        %v1749 = vpop.xlane.xlu0 %1748
        %v1750 = vadd.f32 %v1692, %v1694
        %1751 = vadd.xlane.f32.xlu0 %v1750
        %v1752 = vpop.xlane.xlu0 %1751
        %v1753 = vadd.f32 %v1696, %v1698
        %1754 = vadd.xlane.f32.xlu0 %v1753
        %v1755 = vpop.xlane.xlu0 %1754
        %v1756 = vadd.f32 %v1700, %v1702
        %1757 = vadd.xlane.f32.xlu0 %v1756
        %v1758 = vpop.xlane.xlu0 %1757
        %v1759 = vadd.f32 %v1704, %v1706
        %1760 = vadd.xlane.f32.xlu0 %v1759
        %v1761 = vpop.xlane.xlu0 %1760
        %v1762 = vadd.f32 %v1708, %v1710
        %1763 = vadd.xlane.f32.xlu0 %v1762
        %v1764 = vpop.xlane.xlu0 %1763
        %v1765 = vadd.f32 %v1712, %v1714
        %1766 = vadd.xlane.f32.xlu0 %v1765
        %v1767 = vpop.xlane.xlu0 %1766
        %v1768 = vadd.f32 %v1716, %v1718
        %1769 = vadd.xlane.f32.xlu0 %v1768
        %v1770 = vpop.xlane.xlu0 %1769
        %v1771 = vadd.f32 %v1720, %v1722
        %1772 = vadd.xlane.f32.xlu0 %v1771
        %v1773 = vpop.xlane.xlu0 %1772
        %v1774 = vadd.f32 %v1724, %v1726
        %1775 = vadd.xlane.f32.xlu0 %v1774
        %v1776 = vpop.xlane.xlu0 %1775
        %v1777 = vadd.f32 %v1728, %v1730
        %1778 = vadd.xlane.f32.xlu0 %v1777
        %v1779 = vpop.xlane.xlu0 %1778
        %v1780 = vadd.f32 %v1732, %v1734
        %1781 = vadd.xlane.f32.xlu0 %v1780
        %v1782 = vpop.xlane.xlu0 %1781
        %v1783 = vrcp.pop %v1737
        %v1784 = vrcp.pop %v1740
        %v1785 = vrcp.pop %v1743
        %v1786 = vrcp.pop %v1746
        %v1787 = vrcp.pop %v1749
        %v1788 = vrcp.pop %v1752
        %v1789 = vrcp.pop %v1755
        %v1790 = vrcp.pop %v1758
        %v1791 = vrcp.pop %v1761
        %v1792 = vrcp.pop %v1764
        %v1793 = vrcp.pop %v1767
        %v1794 = vrcp.pop %v1770
        %v1795 = vrcp.pop %v1773
        %v1796 = vrcp.pop %v1776
        %v1797 = vrcp.pop %v1779
        %v1798 = vrcp.pop %v1782
        %v1799 = vmul.f32 %v1672, %v1783
        %v1800 = vmul.f32 %v1674, %v1783
        %v1801 = vmul.f32 %v1676, %v1784
        %v1802 = vmul.f32 %v1678, %v1784
        %v1803 = vmul.f32 %v1680, %v1785
        %v1804 = vmul.f32 %v1682, %v1785
        %v1805 = vmul.f32 %v1684, %v1786
        %v1806 = vmul.f32 %v1686, %v1786
        %v1807 = vmul.f32 %v1688, %v1787
        %v1808 = vmul.f32 %v1690, %v1787
        %v1809 = vmul.f32 %v1692, %v1788
        %v1810 = vmul.f32 %v1694, %v1788
        %v1811 = vmul.f32 %v1696, %v1789
        %v1812 = vmul.f32 %v1698, %v1789
        %v1813 = vmul.f32 %v1700, %v1790
        %v1814 = vmul.f32 %v1702, %v1790
        %v1815 = vmul.f32 %v1704, %v1791
        %v1816 = vmul.f32 %v1706, %v1791
        %v1817 = vmul.f32 %v1708, %v1792
        %v1818 = vmul.f32 %v1710, %v1792
        %v1819 = vmul.f32 %v1712, %v1793
        %v1820 = vmul.f32 %v1714, %v1793
        %v1821 = vmul.f32 %v1716, %v1794
        %v1822 = vmul.f32 %v1718, %v1794
        %v1823 = vmul.f32 %v1720, %v1795
        %v1824 = vmul.f32 %v1722, %v1795
        %v1825 = vmul.f32 %v1724, %v1796
        %v1826 = vmul.f32 %v1726, %v1796
        %v1827 = vmul.f32 %v1728, %v1797
        %v1828 = vmul.f32 %v1730, %v1797
        %v1829 = vmul.f32 %v1732, %v1798
        %v1830 = vmul.f32 %v1734, %v1798
        %1831 = vst [vmem:[%s597] sm:$0xff] %v1799
        %1832 = vst [vmem:[%s597 + $0x8] sm:$0xff] %v1800
        %1833 = vst [vmem:[%s597 + $0x10] sm:$0xff] %v1801
        %1834 = vst [vmem:[%s597 + $0x18] sm:$0xff] %v1802
        %1835 = vst [vmem:[%s597 + $0x20] sm:$0xff] %v1803
        %1836 = vst [vmem:[%s597 + $0x28] sm:$0xff] %v1804
        %1837 = vst [vmem:[%s597 + $0x30] sm:$0xff] %v1805
        %1838 = vst [vmem:[%s597 + $0x38] sm:$0xff] %v1806
        %1839 = vst [vmem:[%s597 + $0x40] sm:$0xff] %v1807
        %1840 = vst [vmem:[%s597 + $0x48] sm:$0xff] %v1808
        %1841 = vst [vmem:[%s597 + $0x50] sm:$0xff] %v1809
        %1842 = vst [vmem:[%s597 + $0x58] sm:$0xff] %v1810
        %1843 = vst [vmem:[%s597 + $0x60] sm:$0xff] %v1811
        %1844 = vst [vmem:[%s597 + $0x68] sm:$0xff] %v1812
        %1845 = vst [vmem:[%s597 + $0x70] sm:$0xff] %v1813
        %1846 = vst [vmem:[%s597 + $0x78] sm:$0xff] %v1814
        %1847 = vst [vmem:[%s597 + $0x80] sm:$0xff] %v1815
        %1848 = vst [vmem:[%s597 + $0x88] sm:$0xff] %v1816
        %1849 = vst [vmem:[%s597 + $0x90] sm:$0xff] %v1817
        %1850 = vst [vmem:[%s597 + $0x98] sm:$0xff] %v1818
        %1851 = vst [vmem:[%s597 + $0xa0] sm:$0xff] %v1819
        %1852 = vst [vmem:[%s597 + $0xa8] sm:$0xff] %v1820
        %1853 = vst [vmem:[%s597 + $0xb0] sm:$0xff] %v1821
        %1854 = vst [vmem:[%s597 + $0xb8] sm:$0xff] %v1822
        %1855 = vst [vmem:[%s597 + $0xc0] sm:$0xff] %v1823
        %1856 = vst [vmem:[%s597 + $0xc8] sm:$0xff] %v1824
        %1857 = vst [vmem:[%s597 + $0xd0] sm:$0xff] %v1825
        %1858 = vst [vmem:[%s597 + $0xd8] sm:$0xff] %v1826
        %1859 = vst [vmem:[%s597 + $0xe0] sm:$0xff] %v1827
        %1860 = vst [vmem:[%s597 + $0xe8] sm:$0xff] %v1828
        %1861 = vst [vmem:[%s597 + $0xf0] sm:$0xff] %v1829
        %1862 = vst [vmem:[%s597 + $0xf8] sm:$0xff] %v1830
        %v1863 = vpack.c.bf16 %v1801, %v1799
        %v1864 = vpack.c.bf16 %v1802, %v1800
        %v1865 = vpack.c.bf16 %v1805, %v1803
        %v1866 = vpack.c.bf16 %v1806, %v1804
        %v1867 = vpack.c.bf16 %v1809, %v1807
        %v1868 = vpack.c.bf16 %v1810, %v1808
        %v1869 = vpack.c.bf16 %v1813, %v1811
        %v1870 = vpack.c.bf16 %v1814, %v1812
        %v1871 = vpack.c.bf16 %v1817, %v1815
        %v1872 = vpack.c.bf16 %v1818, %v1816
        %v1873 = vpack.c.bf16 %v1821, %v1819
        %v1874 = vpack.c.bf16 %v1822, %v1820
        %v1875 = vpack.c.bf16 %v1825, %v1823
        %v1876 = vpack.c.bf16 %v1826, %v1824
        %v1877 = vpack.c.bf16 %v1829, %v1827
        %v1878 = vpack.c.bf16 %v1830, %v1828
        %1879 = vmatprep.subr.bf16.mxu0 0
        %1880 = vmatpush1.bf16.msra.mxu0 %v1462
        %1881 = vmatprep.subr.bf16.mxu0 0
        %1882 = vmatpush1.bf16.msra.mxu0 %v1463
        %1883 = vmatprep.subr.bf16.mxu0 0
        %1884 = vmatpush1.bf16.msra.mxu0 %v1464
        %1885 = vmatprep.subr.bf16.mxu0 0
        %1886 = vmatpush1.bf16.msra.mxu0 %v1465
        %1887 = vmatprep.subr.bf16.mxu0 0
        %1888 = vmatpush1.bf16.msra.mxu0 %v1466
        %1889 = vmatprep.subr.bf16.mxu0 0
        %1890 = vmatpush1.bf16.msra.mxu0 %v1467
        %1891 = vmatprep.subr.bf16.mxu0 0
        %1892 = vmatpush1.bf16.msra.mxu0 %v1468
        %1893 = vmatprep.subr.bf16.mxu0 0
        %1894 = vmatpush1.bf16.msra.mxu0 %v1469
        %1895 = vmatprep.subr.bf16.mxu0 0
        %1896 = vmatpush1.bf16.msra.mxu0 %v1470
        %1897 = vmatprep.subr.bf16.mxu0 0
        %1898 = vmatpush1.bf16.msra.mxu0 %v1471
        %1899 = vmatprep.subr.bf16.mxu0 0
        %1900 = vmatpush1.bf16.msra.mxu0 %v1472
        %1901 = vmatprep.subr.bf16.mxu0 0
        %1902 = vmatpush1.bf16.msra.mxu0 %v1473
        %1903 = vmatprep.subr.bf16.mxu0 0
        %1904 = vmatpush1.bf16.msra.mxu0 %v1474
        %1905 = vmatprep.subr.bf16.mxu0 0
        %1906 = vmatpush1.bf16.msra.mxu0 %v1475
        %1907 = vmatprep.subr.bf16.mxu0 0
        %1908 = vmatpush1.bf16.msra.mxu0 %v1476
        %1909 = vmatprep.subr.bf16.mxu0 0
        %1910 = vmatpush1.bf16.msra.mxu0 %v1477
        %1911 = vmatprep.mubr.bf16.mxu0 %v1864
        %1912 = vmatmul.mubr.bf16.gmra.mrb[0].mxu0 %v1863
        %v1913 = vpop.f32.mrb[0].mxu0
        %v1914 = vadd.f32 0.0, %v1913
        %v1915 = vpop.f32.mrb[0].mxu0
        %v1916 = vpop.f32.mrb[0].mxu0
        %v1917 = vadd.f32 0.0, %v1916
        %v1918 = vpop.f32.mrb[0].mxu0
        %1919 = vmatprep.mubr.bf16.mxu0 %v1866
        %1920 = vmatmul.mubr.bf16.gmra.mrb[0].mxu0 %v1865
        %v1921 = vpop.f32.mrb[0].mxu0
        %v1922 = vadd.f32 0.0, %v1921
        %v1923 = vpop.f32.mrb[0].mxu0
        %v1924 = vpop.f32.mrb[0].mxu0
        %v1925 = vadd.f32 0.0, %v1924
        %v1926 = vpop.f32.mrb[0].mxu0
        %1927 = vmatprep.mubr.bf16.mxu0 %v1868
        %1928 = vmatmul.mubr.bf16.gmra.mrb[0].mxu0 %v1867
        %v1929 = vpop.f32.mrb[0].mxu0
        %v1930 = vadd.f32 0.0, %v1929
        %v1931 = vpop.f32.mrb[0].mxu0
        %v1932 = vpop.f32.mrb[0].mxu0
        %v1933 = vadd.f32 0.0, %v1932
        %v1934 = vpop.f32.mrb[0].mxu0
        %1935 = vmatprep.mubr.bf16.mxu0 %v1870
        %1936 = vmatmul.mubr.bf16.gmra.mrb[0].mxu0 %v1869
        %v1937 = vpop.f32.mrb[0].mxu0
        %v1938 = vadd.f32 0.0, %v1937
        %v1939 = vpop.f32.mrb[0].mxu0
        %v1940 = vpop.f32.mrb[0].mxu0
        %v1941 = vadd.f32 0.0, %v1940
        %v1942 = vpop.f32.mrb[0].mxu0
        %1943 = vmatprep.mubr.bf16.mxu0 %v1872
        %1944 = vmatmul.mubr.bf16.gmra.mrb[0].mxu0 %v1871
        %v1945 = vpop.f32.mrb[0].mxu0
        %v1946 = vadd.f32 0.0, %v1945
        %v1947 = vpop.f32.mrb[0].mxu0
        %v1948 = vpop.f32.mrb[0].mxu0
        %v1949 = vadd.f32 0.0, %v1948
        %v1950 = vpop.f32.mrb[0].mxu0
        %1951 = vmatprep.mubr.bf16.mxu0 %v1874
        %1952 = vmatmul.mubr.bf16.gmra.mrb[0].mxu0 %v1873
        %v1953 = vpop.f32.mrb[0].mxu0
        %v1954 = vadd.f32 0.0, %v1953
        %v1955 = vpop.f32.mrb[0].mxu0
        %v1956 = vpop.f32.mrb[0].mxu0
        %v1957 = vadd.f32 0.0, %v1956
        %v1958 = vpop.f32.mrb[0].mxu0
        %1959 = vmatprep.mubr.bf16.mxu0 %v1876
        %1960 = vmatmul.mubr.bf16.gmra.mrb[0].mxu0 %v1875
        %v1961 = vpop.f32.mrb[0].mxu0
        %v1962 = vadd.f32 0.0, %v1961
        %v1963 = vpop.f32.mrb[0].mxu0
        %v1964 = vpop.f32.mrb[0].mxu0
        %v1965 = vadd.f32 0.0, %v1964
        %v1966 = vpop.f32.mrb[0].mxu0
        %1967 = vmatprep.mubr.bf16.mxu0 %v1878
        %1968 = vmatmul.mubr.bf16.gmra.mrb[0].mxu0 %v1877
        %v1969 = vpop.f32.mrb[0].mxu0
        %v1970 = vadd.f32 0.0, %v1969
        %v1971 = vpop.f32.mrb[0].mxu0
        %v1972 = vpop.f32.mrb[0].mxu0
        %v1973 = vadd.f32 0.0, %v1972
        %v1974 = vpop.f32.mrb[0].mxu0
        %1975 = vdwg.mxu0
        %v1976 = vpack.c.bf16 %v1917, %v1914
        %v1977 = vpack.c.bf16 %v1925, %v1922
        %v1978 = vpack.c.bf16 %v1933, %v1930
        %v1979 = vpack.c.bf16 %v1941, %v1938
        %v1980 = vpack.c.bf16 %v1949, %v1946
        %v1981 = vpack.c.bf16 %v1957, %v1954
        %v1982 = vpack.c.bf16 %v1965, %v1962
        %v1983 = vpack.c.bf16 %v1973, %v1970
        %1984 = vst [vmem:[#allocation4] sm:$0xff] %v1976
        %1985 = vst [vmem:[#allocation4 + $0x8] sm:$0xff] %v1977
        %1986 = vst [vmem:[#allocation4 + $0x10] sm:$0xff] %v1978
        %1987 = vst [vmem:[#allocation4 + $0x18] sm:$0xff] %v1979
        %1988 = vst [vmem:[#allocation4 + $0x20] sm:$0xff] %v1980
        %1989 = vst [vmem:[#allocation4 + $0x28] sm:$0xff] %v1981
        %1990 = vst [vmem:[#allocation4 + $0x30] sm:$0xff] %v1982
        %1991 = vst [vmem:[#allocation4 + $0x38] sm:$0xff] %v1983
        %v1992 = vld [vmem:[#allocation4] sm:$0xff]
        %v1993 = vld [vmem:[#allocation4 + $0x8] sm:$0xff]
        %v1994 = vld [vmem:[#allocation4 + $0x10] sm:$0xff]
        %v1995 = vld [vmem:[#allocation4 + $0x18] sm:$0xff]
        %v1996 = vld [vmem:[#allocation4 + $0x20] sm:$0xff]
        %v1997 = vld [vmem:[#allocation4 + $0x28] sm:$0xff]
        %v1998 = vld [vmem:[#allocation4 + $0x30] sm:$0xff]
        %v1999 = vld [vmem:[#allocation4 + $0x38] sm:$0xff]
        %v2000 = vld [vmem:[#allocation16] sm:$0xf]
        %v2001 = vld [vmem:[#allocation16 + $0x4] sm:$0xf]
        %v2002 = vld [vmem:[#allocation16 + $0x8] sm:$0xf]
        %v2003 = vld [vmem:[#allocation16 + $0xc] sm:$0xf]
        %v2004 = vld [vmem:[#allocation16 + $0x10] sm:$0xf]
        %v2005 = vld [vmem:[#allocation16 + $0x14] sm:$0xf]
        %v2006 = vld [vmem:[#allocation16 + $0x18] sm:$0xf]
        %v2007 = vld [vmem:[#allocation16 + $0x1c] sm:$0xf]
        %v2008 = vld [vmem:[#allocation16 + $0x20] sm:$0xf]
        %v2009 = vld [vmem:[#allocation16 + $0x24] sm:$0xf]
        %v2010 = vld [vmem:[#allocation16 + $0x28] sm:$0xf]
        %v2011 = vld [vmem:[#allocation16 + $0x2c] sm:$0xf]
        %v2012 = vld [vmem:[#allocation16 + $0x30] sm:$0xf]
        %v2013 = vld [vmem:[#allocation16 + $0x34] sm:$0xf]
        %v2014 = vld [vmem:[#allocation16 + $0x38] sm:$0xf]
        %v2015 = vld [vmem:[#allocation16 + $0x3c] sm:$0xf]
        %v2016 = vld [vmem:[%s10] sm:$0x1]
        %v2018 = vlaneseq
        %v2019 = vshrl.u32 %v2018, 7
        %v2020 = vsub.s32 0, %v2019
        %v2021 = vrot.slane %v2016, %v2020
        %v2039 = vunpack.c.l.b16 %v2000
        %v2040 = vunpack.c.l.b16 %v2001
        %v2041 = vunpack.c.l.b16 %v2002
        %v2042 = vunpack.c.l.b16 %v2003
        %v2043 = vunpack.c.l.b16 %v2004
        %v2044 = vunpack.c.l.b16 %v2005
        %v2045 = vunpack.c.l.b16 %v2006
        %v2046 = vunpack.c.l.b16 %v2007
        %v2047 = vunpack.c.l.b16 %v2008
        %v2048 = vunpack.c.l.b16 %v2009
        %v2049 = vunpack.c.l.b16 %v2010
        %v2050 = vunpack.c.l.b16 %v2011
        %v2051 = vunpack.c.l.b16 %v2012
        %v2052 = vunpack.c.l.b16 %v2013
        %v2053 = vunpack.c.l.b16 %v2014
        %v2054 = vunpack.c.l.b16 %v2015
        %v2055 = vpack.c.b16 %v2040, %v2039
        %v2056 = vpack.c.b16 %v2042, %v2041
        %v2057 = vpack.c.b16 %v2044, %v2043
        %v2058 = vpack.c.b16 %v2046, %v2045
        %v2059 = vpack.c.b16 %v2048, %v2047
        %v2060 = vpack.c.b16 %v2050, %v2049
        %v2061 = vpack.c.b16 %v2052, %v2051
        %v2062 = vpack.c.b16 %v2054, %v2053
        %2071 = vmatprep.subr.bf16.mxu0 0
        %2072 = vmatpush1.bf16.msra.mxu0 %v2055
        %2073 = vmatprep.subr.bf16.mxu0 0
        %2074 = vmatpush1.bf16.msra.mxu0 %v2056
        %2075 = vmatprep.subr.bf16.mxu0 0
        %2076 = vmatpush1.bf16.msra.mxu0 %v2057
        %2077 = vmatprep.subr.bf16.mxu0 0
        %2078 = vmatpush1.bf16.msra.mxu0 %v2058
        %2079 = vmatprep.subr.bf16.mxu0 0
        %2080 = vmatpush1.bf16.msra.mxu0 %v2059
        %2081 = vmatprep.subr.bf16.mxu0 0
        %2082 = vmatpush1.bf16.msra.mxu0 %v2060
        %2083 = vmatprep.subr.bf16.mxu0 0
        %2084 = vmatpush1.bf16.msra.mxu0 %v2061
        %2085 = vmatprep.subr.bf16.mxu0 0
        %2086 = vmatpush1.bf16.msra.mxu0 %v2062
        %2087 = vmatprep.subr.bf16.mxu0 0
        %2088 = vmatpush1.bf16.msra.mxu0 0
        %2089 = vmatprep.subr.bf16.mxu0 0
        %2090 = vmatpush1.bf16.msra.mxu0 0
        %2091 = vmatprep.subr.bf16.mxu0 0
        %2092 = vmatpush1.bf16.msra.mxu0 0
        %2093 = vmatprep.subr.bf16.mxu0 0
        %2094 = vmatpush1.bf16.msra.mxu0 0
        %2095 = vmatprep.subr.bf16.mxu0 0
        %2096 = vmatpush1.bf16.msra.mxu0 0
        %2097 = vmatprep.subr.bf16.mxu0 0
        %2098 = vmatpush1.bf16.msra.mxu0 0
        %2099 = vmatprep.subr.bf16.mxu0 0
        %2100 = vmatpush1.bf16.msra.mxu0 0
        %2101 = vmatprep.subr.bf16.mxu0 0
        %2102 = vmatpush1.bf16.msra.mxu0 0
        %2103 = vmatprep.mubr.bf16.mxu0 0
        %2104 = vmatmul.mubr.bf16.gmra.mrb[0].mxu0 %v1992
        %v2105 = vpop.f32.mrb[0].mxu0
        %v2106 = vadd.f32 %v2021, %v2105
        %v2107 = vpop.f32.mrb[0].mxu0
        %v2108 = vpop.f32.mrb[0].mxu0
        %v2109 = vadd.f32 %v2021, %v2108
        %v2110 = vpop.f32.mrb[0].mxu0
        %2111 = vmatprep.mubr.bf16.mxu0 0
        %2112 = vmatmul.mubr.bf16.gmra.mrb[0].mxu0 %v1993
        %v2113 = vpop.f32.mrb[0].mxu0
        %v2114 = vadd.f32 %v2021, %v2113
        %v2115 = vpop.f32.mrb[0].mxu0
        %v2116 = vpop.f32.mrb[0].mxu0
        %v2117 = vadd.f32 %v2021, %v2116
        %v2118 = vpop.f32.mrb[0].mxu0
        %2119 = vmatprep.mubr.bf16.mxu0 0
        %2120 = vmatmul.mubr.bf16.gmra.mrb[0].mxu0 %v1994
        %v2121 = vpop.f32.mrb[0].mxu0
        %v2122 = vadd.f32 %v2021, %v2121
        %v2123 = vpop.f32.mrb[0].mxu0
        %v2124 = vpop.f32.mrb[0].mxu0
        %v2125 = vadd.f32 %v2021, %v2124
        %v2126 = vpop.f32.mrb[0].mxu0
        %2127 = vmatprep.mubr.bf16.mxu0 0
        %2128 = vmatmul.mubr.bf16.gmra.mrb[0].mxu0 %v1995
        %v2129 = vpop.f32.mrb[0].mxu0
        %v2130 = vadd.f32 %v2021, %v2129
        %v2131 = vpop.f32.mrb[0].mxu0
        %v2132 = vpop.f32.mrb[0].mxu0
        %v2133 = vadd.f32 %v2021, %v2132
        %v2134 = vpop.f32.mrb[0].mxu0
        %2135 = vmatprep.mubr.bf16.mxu0 0
        %2136 = vmatmul.mubr.bf16.gmra.mrb[0].mxu0 %v1996
        %v2137 = vpop.f32.mrb[0].mxu0
        %v2138 = vadd.f32 %v2021, %v2137
        %v2139 = vpop.f32.mrb[0].mxu0
        %v2140 = vpop.f32.mrb[0].mxu0
        %v2141 = vadd.f32 %v2021, %v2140
        %v2142 = vpop.f32.mrb[0].mxu0
        %2143 = vmatprep.mubr.bf16.mxu0 0
        %2144 = vmatmul.mubr.bf16.gmra.mrb[0].mxu0 %v1997
        %v2145 = vpop.f32.mrb[0].mxu0
        %v2146 = vadd.f32 %v2021, %v2145
        %v2147 = vpop.f32.mrb[0].mxu0
        %v2148 = vpop.f32.mrb[0].mxu0
        %v2149 = vadd.f32 %v2021, %v2148
        %v2150 = vpop.f32.mrb[0].mxu0
        %2151 = vmatprep.mubr.bf16.mxu0 0
        %2152 = vmatmul.mubr.bf16.gmra.mrb[0].mxu0 %v1998
        %v2153 = vpop.f32.mrb[0].mxu0
        %v2154 = vadd.f32 %v2021, %v2153
        %v2155 = vpop.f32.mrb[0].mxu0
        %v2156 = vpop.f32.mrb[0].mxu0
        %v2157 = vadd.f32 %v2021, %v2156
        %v2158 = vpop.f32.mrb[0].mxu0
        %2159 = vmatprep.mubr.bf16.mxu0 0
        %2160 = vmatmul.mubr.bf16.gmra.mrb[0].mxu0 %v1999
        %v2161 = vpop.f32.mrb[0].mxu0
        %v2162 = vadd.f32 %v2021, %v2161
        %v2163 = vpop.f32.mrb[0].mxu0
        %v2164 = vpop.f32.mrb[0].mxu0
        %v2165 = vadd.f32 %v2021, %v2164
        %v2166 = vpop.f32.mrb[0].mxu0
        %2167 = vdwg.mxu0
        %2168 = vst [vmem:[%s590] sm:$0xff] %v2106
        %2169 = vst [vmem:[%s590 + $0x8] sm:$0xff] %v2109
        %2170 = vst [vmem:[%s590 + $0x10] sm:$0xff] %v2114
        %2171 = vst [vmem:[%s590 + $0x18] sm:$0xff] %v2117
        %2172 = vst [vmem:[%s590 + $0x20] sm:$0xff] %v2122
        %2173 = vst [vmem:[%s590 + $0x28] sm:$0xff] %v2125
        %2174 = vst [vmem:[%s590 + $0x30] sm:$0xff] %v2130
        %2175 = vst [vmem:[%s590 + $0x38] sm:$0xff] %v2133
        %2176 = vst [vmem:[%s590 + $0x40] sm:$0xff] %v2138
        %2177 = vst [vmem:[%s590 + $0x48] sm:$0xff] %v2141
        %2178 = vst [vmem:[%s590 + $0x50] sm:$0xff] %v2146
        %2179 = vst [vmem:[%s590 + $0x58] sm:$0xff] %v2149
        %2180 = vst [vmem:[%s590 + $0x60] sm:$0xff] %v2154
        %2181 = vst [vmem:[%s590 + $0x68] sm:$0xff] %v2157
        %2182 = vst [vmem:[%s590 + $0x70] sm:$0xff] %v2162
        %2183 = vst [vmem:[%s590 + $0x78] sm:$0xff] %v2165
        %s2184 = sand.u32 %s308, 1
        %s2185 = scalar_lea.sflag [#allocation7], %s2184
        %s2186 = sand.u32 %s308, 1
        %s2187 = smul.addr %s2186, 128
        %s2188 = scalar_lea.vmem [#allocation17], %s2187
        %s2189 = sand.u32 %s336, 1
        %s2190 = scalar_lea.sflag [#allocation19], %s2189
        %s2191 = sand.u32 %s336, 1
        %s2192 = smul.addr %s2191, 256
        %s2193 = scalar_lea.vmem [#allocation18], %s2192
        // Predicated region
        $region97: #{tpu_custom_call.1} parent=63 // pred_check
          %p2194 = pneg %p318
        $region98: #{tpu_custom_call.1} parent=63 // pred_check_branch
          %2196 = sbr.rel (%p2194) target = $region100
        $region99: #{tpu_custom_call.1} parent=63 // pred_region
          %s2197 = smul.u32 16, %s43
          %s2199 = ssub.s32 2048, 2048
          %2200 = vsyncadd %s2185, %s2199
          %s2201 = smul.addr %s42, 32
          %s2202 = sadd.s32 %s2197, %s2201
          %s2203 = smul.addr %s2202, 128
          %s2204 = scalar_lea.hbm %s11, %s2203
          %s2205 = sshll.u32 %s2188, 4
          %s2206 = int_to_ptr.vmem [resolvable:$true] %s2205
          %2211 = dma.vmem_to_hbm [thread:$0]  %s2206, 2048, %s2204, %s2185, 128, 128, 8
        $region100: #{tpu_custom_call.1} parent=63 // pred_fallthru
          _
        // Predicated region
        $region101: #{tpu_custom_call.1} parent=63 // pred_check
          %p2212 = pneg %p346
        $region102: #{tpu_custom_call.1} parent=63 // pred_check_branch
          %2214 = sbr.rel (%p2212) target = $region104
        $region103: #{tpu_custom_call.1} parent=63 // pred_region
          %s2215 = smul.u32 16, %s43
          %s2217 = ssub.s32 4096, 4096
          %2218 = vsyncadd %s2190, %s2217
          %s2219 = smul.addr %s2215, 2
          %s2220 = smul.addr %s42, 64
          %s2221 = sadd.s32 %s2219, %s2220
          %s2222 = smul.addr %s2221, 128
          %s2223 = scalar_lea.hbm %s12, %s2222
          %s2224 = sshll.u32 %s2193, 4
          %s2225 = int_to_ptr.vmem [resolvable:$true] %s2224
          %2230 = dma.vmem_to_hbm [thread:$0]  %s2225, 4096, %s2223, %s2190, 256, 256, 16
        $region104: #{tpu_custom_call.1} parent=63 // pred_fallthru
          _
      $region64: #{tpu_custom_call.1} parent=5 // pred_fallthru
        _
      %p2231 = scmp.le.s32.totalorder 2, %s33
      // Predicated region
      $region105: #{tpu_custom_call.1} parent=5 // pred_check
        %p2232 = pneg %p2231
      $region106: #{tpu_custom_call.1} parent=5 // pred_check_branch
        %2234 = sbr.rel (%p2232) target = $region108
      $region107: #{tpu_custom_call.1} parent=5 // pred_region
        %s2235 = ssub.s32 %s33, 2
        // Predicated region
        $region109: #{tpu_custom_call.1} parent=107 // pred_check
          %p2236 = pneg %p324
        $region110: #{tpu_custom_call.1} parent=107 // pred_check_branch
          %2238 = sbr.rel (%p2236) target = $region112
        $region111: #{tpu_custom_call.1} parent=107 // pred_region
          %s2239 = sand.u32 %s309, 1
          %s2240 = scalar_lea.sflag [#allocation7], %s2239
          %s2241 = sand.u32 %s309, 1
          %s2242 = smul.addr %s2241, 128
          %s2243 = scalar_lea.vmem [#allocation17], %s2242
          %2244 = dma.done %s2240, 2048
        $region112: #{tpu_custom_call.1} parent=107 // pred_fallthru
          _
        // Predicated region
        $region113: #{tpu_custom_call.1} parent=107 // pred_check
          %p2245 = pneg %p352
        $region114: #{tpu_custom_call.1} parent=107 // pred_check_branch
          %2247 = sbr.rel (%p2245) target = $region116
        $region115: #{tpu_custom_call.1} parent=107 // pred_region
          %s2248 = sand.u32 %s337, 1
          %s2249 = scalar_lea.sflag [#allocation19], %s2248
          %s2250 = sand.u32 %s337, 1
          %s2251 = smul.addr %s2250, 256
          %s2252 = scalar_lea.vmem [#allocation18], %s2251
          %2253 = dma.done %s2249, 4096
        $region116: #{tpu_custom_call.1} parent=107 // pred_fallthru
          _
      $region108: #{tpu_custom_call.1} parent=5 // pred_fallthru
        _
    $region6: #{tpu_custom_call.1} parent=1 // loop_footer
      %s37 = sadd.s32 1, %s33
    $region7: #{tpu_custom_call.1} parent=1 // loop_footer_branch
      %32 = sbr.rel target = $region3
    $region8: #{tpu_custom_call.1} parent=1 // loop_exit
      _
    %2254 = vsyncpa [#allocation6], 1
    %s2255 = scalar_lea.sflag [#allocation6], 1
    %2256 = vsyncpa %s2255, 1
    %2257 = vsyncpa [#allocation9], 1
    %s2258 = scalar_lea.sflag [#allocation9], 1
    %2259 = vsyncpa %s2258, 1
    %2260 = vsyncpa [#allocation12], 1
    %2261 = vsyncpa [#allocation15], 1
    %2262 = vsyncpa [#allocation7], 1
    %s2263 = scalar_lea.sflag [#allocation7], 1
    %2264 = vsyncpa %s2263, 1
    %2265 = vsyncpa [#allocation19], 1
    %s2266 = scalar_lea.sflag [#allocation19], 1
    %2267 = vsyncpa %s2266, 1

</llo_original>
